<compile_context>
chip_gen: v7x
topology: tpu7x:2x2x1
jax: 0.10.0
libtpu: 0.0.40
codegen_flags: <defaults>
</compile_context>

<pallas_src>
import functools

import jax
import jax.numpy as jnp
from jax.experimental import pallas as pl
from jax.experimental.pallas import tpu as pltpu


def _self_attention_kernel(v_ref, k_ref, q_ref, wqkv_ref, wo_ref, bo_ref,
                           o_ref, *, heads):
    mxu_dtype = wqkv_ref.dtype

    vals = v_ref[...].astype(mxu_dtype)          # (Lk, E)
    keys = k_ref[...].astype(mxu_dtype)          # (Lk, E)
    qry = q_ref[...].astype(mxu_dtype)           # (tq, E)

    lk, e = vals.shape
    tq = qry.shape[0]

    wv = wqkv_ref[0]                             # (H, E, D)
    wk = wqkv_ref[1]                             # (H, E, D)
    wq = wqkv_ref[2]                             # (H, E, D), 1/sqrt(E) folded in

    # Heads-batched projections: broadcast the activations over a leading
    # heads axis so every subsequent matmul is a batched dot_general with a
    # leading batch dim — no sub-128-lane slices, no in-kernel transposes.
    vals_b = jnp.broadcast_to(vals[None], (heads, lk, e))
    keys_b = jnp.broadcast_to(keys[None], (heads, lk, e))
    qry_b = jnp.broadcast_to(qry[None], (heads, tq, e))

    V = jnp.einsum('hle,hed->hld', vals_b, wv,
                   preferred_element_type=jnp.float32)        # (H, Lk, D)
    K = jnp.einsum('hle,hed->hld', keys_b, wk,
                   preferred_element_type=jnp.float32)        # (H, Lk, D)
    Q = jnp.einsum('hqe,hed->hqd', qry_b, wq,
                   preferred_element_type=jnp.float32)        # (H, tq, D)

    # energy[h,q,k] = sum_d Q[h,q,d] * K[h,k,d]   (batch h, contract D)
    energy = jnp.einsum('hqd,hkd->hqk',
                        Q.astype(mxu_dtype), K.astype(mxu_dtype),
                        preferred_element_type=jnp.float32)   # (H, tq, Lk)

    # f32 softmax over the key axis; exact reciprocal (still EUP, off the
    # VPU critical path) per the review's correctness note.
    m = jnp.max(energy, axis=-1, keepdims=True)
    p = jnp.exp(energy - m)
    denom = jnp.sum(p, axis=-1, keepdims=True)
    attn = p * pl.reciprocal(denom, approx=False)

    head_out = jnp.einsum('hqk,hkd->hqd',
                          attn.astype(mxu_dtype), V.astype(mxu_dtype),
                          preferred_element_type=jnp.float32)  # (H, tq, D)

    # Heads-batched output projection; the heads reduction is a cheap
    # leading-axis VPU sum (no lane-axis concat of head outputs).  Padded
    # columns of wo/bo are exactly zero, so the padded lanes stay zero.
    out_h = jnp.einsum('hqd,hde->hqe',
                       head_out.astype(mxu_dtype), wo_ref[...],
                       preferred_element_type=jnp.float32)     # (H, tq, e_pad)
    o_ref[...] = jnp.sum(out_h, axis=0) + bo_ref[...]


def prepare_params(params, *, embed_size, heads, mxu_dtype=jnp.bfloat16):
    """One-time parameter preparation (hoisted out of the per-call path)."""
    head_dim = embed_size // heads
    assert head_dim * heads == embed_size, 'embed_size must be divisible by heads'
    e_pad = ((embed_size + 127) // 128) * 128

    def per_head(w):  # nn.Linear weight (E_out, E_in); y = x @ w.T
        # layout [h, e_in, d] = w.T[e_in, h*D + d]
        return w.T.reshape(embed_size, heads, head_dim).transpose(1, 0, 2)

    # Fold the module's 1/sqrt(embed_size) softmax scale into the Q weights.
    wq_h = per_head(params['queries_w']) * (1.0 / (embed_size ** 0.5))
    w_qkv = jnp.stack([per_head(params['values_w']),
                       per_head(params['keys_w']),
                       wq_h], axis=0).astype(mxu_dtype)        # (3, H, E, D)

    # Output projection, per-head rows, lane-padded columns (zeros in pad).
    wo_t = params['fc_out_w'].T.reshape(heads, head_dim, embed_size)
    wo_p = jnp.zeros((heads, head_dim, e_pad), jnp.float32)
    wo_p = wo_p.at[:, :, :embed_size].set(wo_t).astype(mxu_dtype)
    bo_p = jnp.zeros((1, e_pad), jnp.float32)
    bo_p = bo_p.at[:, :embed_size].set(
        params['fc_out_b'].reshape(1, embed_size))

    return {'w_qkv': w_qkv, 'wo': wo_p, 'bo': bo_p,
            'embed_size': embed_size, 'heads': heads,
            'head_dim': head_dim, 'e_pad': e_pad}


def self_attention(values, keys, query, prepped):
    """Pallas forward matching CLSPRec.SelfAttention.forward.

    `prepped` comes from prepare_params(); the per-call path is only the
    pallas_call plus slicing off the lane padding.
    """
    embed_size = prepped['embed_size']
    heads = prepped['heads']
    head_dim = prepped['head_dim']
    e_pad = prepped['e_pad']

    lq = query.shape[0]
    lk = keys.shape[0]
    assert values.shape[0] == lk, 'key_len must equal value_len'
    assert values.shape[1] == keys.shape[1] == query.shape[1] == embed_size

    # Tile the query axis; "parallel" so multi-TensorCore parts (v7x) can
    # shard it once there is more than one tile.
    tq = lq if lq <= 128 else 128
    assert lq % tq == 0, 'query_len must be a multiple of the q tile'
    grid = (lq // tq,)

    kernel = functools.partial(_self_attention_kernel, heads=heads)

    flops = 2 * heads * head_dim * (
        embed_size * (lq + 2 * lk)      # Q/K/V projections
        + 2 * lq * lk                   # energy + PV
        + lq * e_pad)                   # output projection
    cost = pl.CostEstimate(
        flops=flops,
        transcendentals=heads * lq * lk,
        bytes_accessed=(values.nbytes + keys.nbytes + query.nbytes
                        + prepped['w_qkv'].nbytes + prepped['wo'].nbytes
                        + prepped['bo'].nbytes + lq * e_pad * 4))

    out_padded = pl.pallas_call(
        kernel,
        grid=grid,
        in_specs=[
            pl.BlockSpec((lk, embed_size), lambda i: (0, 0)),            # values
            pl.BlockSpec((lk, embed_size), lambda i: (0, 0)),            # keys
            pl.BlockSpec((tq, embed_size), lambda i: (i, 0)),            # query
            pl.BlockSpec((3, heads, embed_size, head_dim),
                         lambda i: (0, 0, 0, 0)),                        # W_v/k/q
            pl.BlockSpec((heads, head_dim, e_pad), lambda i: (0, 0, 0)), # W_o
            pl.BlockSpec((1, e_pad), lambda i: (0, 0)),                  # b_o
        ],
        out_specs=pl.BlockSpec((tq, e_pad), lambda i: (i, 0)),
        out_shape=jax.ShapeDtypeStruct((lq, e_pad), jnp.float32),
        compiler_params=pltpu.CompilerParams(
            dimension_semantics=('parallel',)),
        cost_estimate=cost,
    )(values, keys, query, prepped['w_qkv'], prepped['wo'], prepped['bo'])

    # TODO(synk): at production seq_len switch to flash-style tiling (Lq
    # "parallel" x Lk "arbitrary" grid, online-softmax m/l/acc VMEM scratch,
    # pl.when init/finalize), with tile sizes re-derived for v7x's 64 MiB VMEM
    # and vmem_limit_bytes set explicitly.
    return out_padded[:, :embed_size]


def _reference(values, keys, query, params, *, embed_size, heads):
    """Pure-JAX reference mirroring the PyTorch module."""
    head_dim = embed_size // heads
    V = values @ params['values_w'].T
    K = keys @ params['keys_w'].T
    Q = query @ params['queries_w'].T
    V = V.reshape(-1, heads, head_dim)
    K = K.reshape(-1, heads, head_dim)
    Q = Q.reshape(-1, heads, head_dim)
    energy = jnp.einsum('qhd,khd->hqk', Q, K)
    attn = jax.nn.softmax(energy / (embed_size ** 0.5), axis=2)
    out = jnp.einsum('hql,lhd->qhd', attn, V).reshape(-1, heads * head_dim)
    return out @ params['fc_out_w'].T + params['fc_out_b']


if __name__ == "__main__":
    embed_size, heads = 32, 4
    seq_len = 8

    key = jax.random.PRNGKey(0)
    ks = jax.random.split(key, 8)
    scale = 0.1
    params = {
        'values_w':  scale * jax.random.normal(ks[0], (embed_size, embed_size), jnp.float32),
        'keys_w':    scale * jax.random.normal(ks[1], (embed_size, embed_size), jnp.float32),
        'queries_w': scale * jax.random.normal(ks[2], (embed_size, embed_size), jnp.float32),
        'fc_out_w':  scale * jax.random.normal(ks[3], (embed_size, embed_size), jnp.float32),
        'fc_out_b':  scale * jax.random.normal(ks[4], (embed_size,), jnp.float32),
    }
    values = jax.random.normal(ks[5], (seq_len, embed_size), jnp.float32)
    keys_in = jax.random.normal(ks[6], (seq_len, embed_size), jnp.float32)
    query = jax.random.normal(ks[7], (seq_len, embed_size), jnp.float32)

    # High-precision pure-JAX reference.
    with jax.default_matmul_precision('float32'):
        ref = _reference(values, keys_in, query, params,
                         embed_size=embed_size, heads=heads)
    ref = jax.block_until_ready(ref)

    # 1) f32 MXU operands: structural-correctness check (tight tolerance).
    prepped_f32 = prepare_params(params, embed_size=embed_size, heads=heads,
                                 mxu_dtype=jnp.float32)
    out_f32 = jax.block_until_ready(
        self_attention(values, keys_in, query, prepped_f32))
    assert out_f32.shape == (seq_len, embed_size)
    assert jnp.allclose(out_f32, ref, atol=2e-3, rtol=2e-3), 'f32 mismatch vs reference'

    # 2) bf16 MXU operands (v5e/v6e/v7x fast MXU path), f32 accumulation and
    #    f32 softmax — looser tolerance due to bf16 operand rounding.
    prepped_bf16 = prepare_params(params, embed_size=embed_size, heads=heads,
                                  mxu_dtype=jnp.bfloat16)
    out_bf16 = jax.block_until_ready(
        self_attention(values, keys_in, query, prepped_bf16))
    assert out_bf16.shape == (seq_len, embed_size)
    assert jnp.allclose(out_bf16, ref, atol=2.5e-2, rtol=2.5e-2), 'bf16 mismatch vs reference'

    print("KERNEL_OK")
</pallas_src>

<mosaic_0001>
module attributes {stable_mosaic.version = 11 : i64} {
  func.func @_self_attention_kernel(%arg0: i32, %arg1: memref<8x32xf32, #tpu.memory_space<vmem>>, %arg2: memref<8x32xf32, #tpu.memory_space<vmem>>, %arg3: memref<8x32xf32, #tpu.memory_space<vmem>>, %arg4: memref<3x4x32x8xf32, #tpu.memory_space<vmem>>, %arg5: memref<4x8x128xf32, #tpu.memory_space<vmem>>, %arg6: memref<1x128xf32, #tpu.memory_space<vmem>>, %arg7: memref<8x128xf32, #tpu.memory_space<vmem>>) attributes {dimension_semantics = [#tpu.dimension_semantics<parallel>], iteration_bounds = array<i64: 1>, scalar_prefetch = 0 : i64, scratch_operands = 0 : i64, tpu.core_type = #tpu.core_type<tc>, window_params = [{pipeline_mode = #tpu.pipeline_mode<synchronous>, transform_indices = @transform_0, window_bounds = array<i64: 8, 32>}, {pipeline_mode = #tpu.pipeline_mode<synchronous>, transform_indices = @transform_1, window_bounds = array<i64: 8, 32>}, {transform_indices = @transform_2, window_bounds = array<i64: 8, 32>}, {pipeline_mode = #tpu.pipeline_mode<synchronous>, transform_indices = @transform_3, window_bounds = array<i64: 3, 4, 32, 8>}, {pipeline_mode = #tpu.pipeline_mode<synchronous>, transform_indices = @transform_4, window_bounds = array<i64: 4, 8, 128>}, {pipeline_mode = #tpu.pipeline_mode<synchronous>, transform_indices = @transform_5, window_bounds = array<i64: 1, 128>}, {transform_indices = @transform_6, window_bounds = array<i64: 8, 128>}]} {
    %c0 = arith.constant 0 : index
    %c0_0 = arith.constant 0 : index
    %0 = vector.load %arg1[%c0, %c0_0] : memref<8x32xf32, #tpu.memory_space<vmem>>, vector<8x32xf32>
    %c0_1 = arith.constant 0 : index
    %c0_2 = arith.constant 0 : index
    %1 = vector.load %arg2[%c0_1, %c0_2] : memref<8x32xf32, #tpu.memory_space<vmem>>, vector<8x32xf32>
    %c0_3 = arith.constant 0 : index
    %c0_4 = arith.constant 0 : index
    %2 = vector.load %arg3[%c0_3, %c0_4] : memref<8x32xf32, #tpu.memory_space<vmem>>, vector<8x32xf32>
    %c0_5 = arith.constant 0 : index
    %c0_6 = arith.constant 0 : index
    %c0_7 = arith.constant 0 : index
    %c0_8 = arith.constant 0 : index
    %3 = vector.load %arg4[%c0_5, %c0_6, %c0_7, %c0_8] : memref<3x4x32x8xf32, #tpu.memory_space<vmem>>, vector<1x4x32x8xf32>
    %4 = vector.shape_cast %3 : vector<1x4x32x8xf32> to vector<4x32x8xf32>
    %c1 = arith.constant 1 : index
    %c0_9 = arith.constant 0 : index
    %c0_10 = arith.constant 0 : index
    %c0_11 = arith.constant 0 : index
    %5 = vector.load %arg4[%c1, %c0_9, %c0_10, %c0_11] : memref<3x4x32x8xf32, #tpu.memory_space<vmem>>, vector<1x4x32x8xf32>
    %6 = vector.shape_cast %5 : vector<1x4x32x8xf32> to vector<4x32x8xf32>
    %c2 = arith.constant 2 : index
    %c0_12 = arith.constant 0 : index
    %c0_13 = arith.constant 0 : index
    %c0_14 = arith.constant 0 : index
    %7 = vector.load %arg4[%c2, %c0_12, %c0_13, %c0_14] : memref<3x4x32x8xf32, #tpu.memory_space<vmem>>, vector<1x4x32x8xf32>
    %8 = vector.shape_cast %7 : vector<1x4x32x8xf32> to vector<4x32x8xf32>
    %9 = vector.shape_cast %0 : vector<8x32xf32> to vector<1x8x32xf32>
    %10 = vector.shape_cast %9 : vector<1x8x32xf32> to vector<1x8x32xf32>
    %11 = vector.broadcast %10 : vector<1x8x32xf32> to vector<4x8x32xf32>
    %12 = vector.shape_cast %1 : vector<8x32xf32> to vector<1x8x32xf32>
    %13 = vector.shape_cast %12 : vector<1x8x32xf32> to vector<1x8x32xf32>
    %14 = vector.broadcast %13 : vector<1x8x32xf32> to vector<4x8x32xf32>
    %15 = vector.shape_cast %2 : vector<8x32xf32> to vector<1x8x32xf32>
    %16 = vector.shape_cast %15 : vector<1x8x32xf32> to vector<1x8x32xf32>
    %17 = vector.broadcast %16 : vector<1x8x32xf32> to vector<4x8x32xf32>
    "tpu.trace_start"() <{level = 10 : i32, message = "hle,hed->hld"}> : () -> ()
    %cst = arith.constant dense<0.000000e+00> : vector<4x8x8xf32>
    %18 = tpu.matmul %11, %4, %cst {dimension_numbers = #tpu.dot_dimension_numbers<[2], [1], [1], [2], [0, 0, 0, 1, 1, 2], [0], [0]>} : vector<4x8x32xf32>, vector<4x32x8xf32>, vector<4x8x8xf32> -> vector<4x8x8xf32>
    %cst_15 = arith.constant dense<0.000000e+00> : vector<4x8x8xf32>
    %19 = tpu.matmul %14, %6, %cst_15 {dimension_numbers = #tpu.dot_dimension_numbers<[2], [1], [1], [2], [0, 0, 0, 1, 1, 2], [0], [0]>} : vector<4x8x32xf32>, vector<4x32x8xf32>, vector<4x8x8xf32> -> vector<4x8x8xf32>
    "tpu.trace_stop"() : () -> ()
    "tpu.trace_start"() <{level = 10 : i32, message = "hqe,hed->hqd"}> : () -> ()
    %cst_16 = arith.constant dense<0.000000e+00> : vector<4x8x8xf32>
    %20 = tpu.matmul %17, %8, %cst_16 {dimension_numbers = #tpu.dot_dimension_numbers<[2], [1], [1], [2], [0, 0, 0, 1, 1, 2], [0], [0]>} : vector<4x8x32xf32>, vector<4x32x8xf32>, vector<4x8x8xf32> -> vector<4x8x8xf32>
    "tpu.trace_stop"() : () -> ()
    "tpu.trace_start"() <{level = 10 : i32, message = "hqd,hkd->hqk"}> : () -> ()
    %cst_17 = arith.constant dense<0.000000e+00> : vector<4x8x8xf32>
    %21 = tpu.matmul %20, %19, %cst_17 {dimension_numbers = #tpu.dot_dimension_numbers<[2], [2], [1], [1], [0, 0, 0, 1, 1, 1], [0], [0]>} : vector<4x8x8xf32>, vector<4x8x8xf32>, vector<4x8x8xf32> -> vector<4x8x8xf32>
    "tpu.trace_stop"() : () -> ()
    %cst_18 = arith.constant dense<0xFF800000> : vector<4x8xf32>
    %22 = vector.multi_reduction <maximumf>, %21, %cst_18 [2] : vector<4x8x8xf32> to vector<4x8xf32>
    %23 = vector.shape_cast %22 : vector<4x8xf32> to vector<4x8x1xf32>
    %24 = vector.broadcast %23 : vector<4x8x1xf32> to vector<4x8x8xf32>
    %25 = arith.subf %21, %24 : vector<4x8x8xf32>
    %26 = math.exp %25 : vector<4x8x8xf32>
    %cst_19 = arith.constant dense<0.000000e+00> : vector<4x8xf32>
    %27 = vector.multi_reduction <add>, %26, %cst_19 [2] : vector<4x8x8xf32> to vector<4x8xf32>
    %28 = vector.shape_cast %27 : vector<4x8xf32> to vector<4x8x1xf32>
    %29 = tpu.reciprocal %28 : vector<4x8x1xf32> -> vector<4x8x1xf32>
    %30 = vector.broadcast %29 : vector<4x8x1xf32> to vector<4x8x8xf32>
    %31 = arith.mulf %26, %30 : vector<4x8x8xf32>
    "tpu.trace_start"() <{level = 10 : i32, message = "hqk,hkd->hqd"}> : () -> ()
    %cst_20 = arith.constant dense<0.000000e+00> : vector<4x8x8xf32>
    %32 = tpu.matmul %31, %18, %cst_20 {dimension_numbers = #tpu.dot_dimension_numbers<[2], [1], [1], [2], [0, 0, 0, 1, 1, 2], [0], [0]>} : vector<4x8x8xf32>, vector<4x8x8xf32>, vector<4x8x8xf32> -> vector<4x8x8xf32>
    "tpu.trace_stop"() : () -> ()
    %c0_21 = arith.constant 0 : index
    %c0_22 = arith.constant 0 : index
    %c0_23 = arith.constant 0 : index
    %33 = vector.load %arg5[%c0_21, %c0_22, %c0_23] : memref<4x8x128xf32, #tpu.memory_space<vmem>>, vector<4x8x128xf32>
    "tpu.trace_start"() <{level = 10 : i32, message = "hqd,hde->hqe"}> : () -> ()
    %cst_24 = arith.constant dense<0.000000e+00> : vector<4x8x128xf32>
    %34 = tpu.matmul %32, %33, %cst_24 {dimension_numbers = #tpu.dot_dimension_numbers<[2], [1], [1], [2], [0, 0, 0, 1, 1, 2], [0], [0]>} : vector<4x8x8xf32>, vector<4x8x128xf32>, vector<4x8x128xf32> -> vector<4x8x128xf32>
    "tpu.trace_stop"() : () -> ()
    %cst_25 = arith.constant dense<0.000000e+00> : vector<8x128xf32>
    %35 = vector.multi_reduction <add>, %34, %cst_25 [0] : vector<4x8x128xf32> to vector<8x128xf32>
    %c0_26 = arith.constant 0 : index
    %c0_27 = arith.constant 0 : index
    %36 = vector.load %arg6[%c0_26, %c0_27] : memref<1x128xf32, #tpu.memory_space<vmem>>, vector<1x128xf32>
    %37 = vector.broadcast %36 : vector<1x128xf32> to vector<8x128xf32>
    %38 = arith.addf %35, %37 : vector<8x128xf32>
    %c0_28 = arith.constant 0 : index
    %c0_29 = arith.constant 0 : index
    %39 = vector.load %arg7[%c0_28, %c0_29] : memref<8x128xf32, #tpu.memory_space<vmem>>, vector<8x128xf32>
    tpu.vector_store %arg7[%c0_28, %c0_29], %38 {strides = array<i32>} : memref<8x128xf32, #tpu.memory_space<vmem>>, vector<8x128xf32>,
    return
  }
  func.func @transform_0(%arg0: i32) -> (i32, i32) {
    %c0_i32 = arith.constant 0 : i32
    %c0_i32_0 = arith.constant 0 : i32
    %c0_i32_1 = arith.constant 0 : i32
    return %c0_i32, %c0_i32_0 : i32, i32
  }
  func.func @transform_1(%arg0: i32) -> (i32, i32) {
    %c0_i32 = arith.constant 0 : i32
    %c0_i32_0 = arith.constant 0 : i32
    %c0_i32_1 = arith.constant 0 : i32
    return %c0_i32, %c0_i32_0 : i32, i32
  }
  func.func @transform_2(%arg0: i32) -> (i32, i32) {
    %c0_i32 = arith.constant 0 : i32
    %c0_i32_0 = arith.constant 0 : i32
    return %arg0, %c0_i32 : i32, i32
  }
  func.func @transform_3(%arg0: i32) -> (i32, i32, i32, i32) {
    %c0_i32 = arith.constant 0 : i32
    %c0_i32_0 = arith.constant 0 : i32
    %c0_i32_1 = arith.constant 0 : i32
    %c0_i32_2 = arith.constant 0 : i32
    %c0_i32_3 = arith.constant 0 : i32
    return %c0_i32, %c0_i32_0, %c0_i32_1, %c0_i32_2 : i32, i32, i32, i32
  }
  func.func @transform_4(%arg0: i32) -> (i32, i32, i32) {
    %c0_i32 = arith.constant 0 : i32
    %c0_i32_0 = arith.constant 0 : i32
    %c0_i32_1 = arith.constant 0 : i32
    %c0_i32_2 = arith.constant 0 : i32
    return %c0_i32, %c0_i32_0, %c0_i32_1 : i32, i32, i32
  }
  func.func @transform_5(%arg0: i32) -> (i32, i32) {
    %c0_i32 = arith.constant 0 : i32
    %c0_i32_0 = arith.constant 0 : i32
    %c0_i32_1 = arith.constant 0 : i32
    return %c0_i32, %c0_i32_0 : i32, i32
  }
  func.func @transform_6(%arg0: i32) -> (i32, i32) {
    %c0_i32 = arith.constant 0 : i32
    %c0_i32_0 = arith.constant 0 : i32
    return %arg0, %c0_i32 : i32, i32
  }
}

</mosaic_0001>

<llo_original>
// kernel: tpu_custom_call.1
$region0: #{tpu_custom_call.1}
  #allocation0 [shape = 'u32[]', space=smem, size = 0x4, offset = 0x4, fixed_abs, tag = 'smem constant byte address 0x4 - core index']
  #allocation1 [shape = 'u32[144,128]{1,0:T(1,128)}', space=vmem, size = 0x12000, scoped, tag = 'internal scratch']
  %s0 = inlined_call_operand.vmem [shape: f32[8,32], index: 0, kind: input, shape index: {}]
  %s1 = inlined_call_operand.vmem [shape: f32[8,32], index: 1, kind: input, shape index: {}]
  %s2 = inlined_call_operand.vmem [shape: f32[8,32], index: 2, kind: input, shape index: {}]
  %s3 = inlined_call_operand.vmem [shape: f32[3,4,32,8], index: 3, kind: input, shape index: {}]
  %s4 = inlined_call_operand.vmem [shape: f32[4,8,128], index: 4, kind: input, shape index: {}]
  %s5 = inlined_call_operand.vmem [shape: f32[1,128], index: 5, kind: input, shape index: {}]
  %s6 = inlined_call_operand.hbm [shape: f32[8,128], index: 6, kind: output, shape index: {}]
  %s7 = sld [smem:[#allocation0]]
  $region34: #{tpu_custom_call.1} parent=0
    _
  %s9 = ssub.s32 1, %s7
  %s10 = scalar_select 0, %s9, %s7
  $region1: #{tpu_custom_call.1} parent=0
    #allocation2 [shape = 'u8[4096]{0}', space=vmem, size = 0x1000, scoped, tag = 'output window, operand 0, single buffered']
    #allocation3 [shape = 's32[1]{0}', space=sflag, size = 0x4, scoped, tag = 'scoped memory for tpu_custom_call.1']
    %11 = vsyncpa [#allocation3], 0
    // Predicated region
    $region2: #{tpu_custom_call.1} parent=1 // pred_check
      _
    $region3: #{tpu_custom_call.1} parent=1 // pred_check_branch
      %13 = sbr.rel (0) target = $region5
    $region4: #{tpu_custom_call.1} parent=1 // pred_region
      _
    $region5: #{tpu_custom_call.1} parent=1 // pred_fallthru
      _
    // Predicated region
    $region6: #{tpu_custom_call.1} parent=1 // pred_check
      _
    $region7: #{tpu_custom_call.1} parent=1 // pred_check_branch
      %15 = sbr.rel (0) target = $region9
    $region8: #{tpu_custom_call.1} parent=1 // pred_region
      _
    $region9: #{tpu_custom_call.1} parent=1 // pred_fallthru
      _
    // Predicated region
    $region10: #{tpu_custom_call.1} parent=1 // pred_check
      _
    $region11: #{tpu_custom_call.1} parent=1 // pred_check_branch
      %17 = sbr.rel (0) target = $region13
    $region12: #{tpu_custom_call.1} parent=1 // pred_region
      _
    $region13: #{tpu_custom_call.1} parent=1 // pred_fallthru
      _
    // Predicated region
    $region14: #{tpu_custom_call.1} parent=1 // pred_check
      _
    $region15: #{tpu_custom_call.1} parent=1 // pred_check_branch
      %19 = sbr.rel (0) target = $region17
    $region16: #{tpu_custom_call.1} parent=1 // pred_region
      _
    $region17: #{tpu_custom_call.1} parent=1 // pred_fallthru
      _
    // Predicated region
    $region18: #{tpu_custom_call.1} parent=1 // pred_check
      _
    $region19: #{tpu_custom_call.1} parent=1 // pred_check_branch
      %21 = sbr.rel (0) target = $region21
    $region20: #{tpu_custom_call.1} parent=1 // pred_region
      _
    $region21: #{tpu_custom_call.1} parent=1 // pred_fallthru
      _
    // Predicated region
    $region22: #{tpu_custom_call.1} parent=1 // pred_check
      _
    $region23: #{tpu_custom_call.1} parent=1 // pred_check_branch
      %23 = sbr.rel (0) target = $region25
    $region24: #{tpu_custom_call.1} parent=1 // pred_region
      _
    $region25: #{tpu_custom_call.1} parent=1 // pred_fallthru
      _
    %v24 = vld [vmem:[%s0] sm:$0xff]
    %v25 = vld [vmem:[%s1] sm:$0xff]
    %v26 = vld [vmem:[%s2] sm:$0xff]
    %v27 = vld [vmem:[%s3] sm:$0xff]
    %v28 = vld [vmem:[%s3 + $0x8] sm:$0xff]
    %v29 = vld [vmem:[%s3 + $0x10] sm:$0xff]
    %v30 = vld [vmem:[%s3 + $0x18] sm:$0xff]
    %v31 = vld [vmem:[%s3 + $0x20] sm:$0xff]
    %v32 = vld [vmem:[%s3 + $0x28] sm:$0xff]
    %v33 = vld [vmem:[%s3 + $0x30] sm:$0xff]
    %v34 = vld [vmem:[%s3 + $0x38] sm:$0xff]
    %v35 = vld [vmem:[%s3 + $0x40] sm:$0xff]
    %v36 = vld [vmem:[%s3 + $0x48] sm:$0xff]
    %v37 = vld [vmem:[%s3 + $0x50] sm:$0xff]
    %v38 = vld [vmem:[%s3 + $0x58] sm:$0xff]
    %v39 = vld [vmem:[%s3 + $0x60] sm:$0xff]
    %v40 = vld [vmem:[%s3 + $0x68] sm:$0xff]
    %v41 = vld [vmem:[%s3 + $0x70] sm:$0xff]
    %v42 = vld [vmem:[%s3 + $0x78] sm:$0xff]
    %s43 = scalar_lea.vmem %s3, 128
    %v44 = vld [vmem:[%s43] sm:$0xff]
    %v45 = vld [vmem:[%s43 + $0x8] sm:$0xff]
    %v46 = vld [vmem:[%s43 + $0x10] sm:$0xff]
    %v47 = vld [vmem:[%s43 + $0x18] sm:$0xff]
    %v48 = vld [vmem:[%s43 + $0x20] sm:$0xff]
    %v49 = vld [vmem:[%s43 + $0x28] sm:$0xff]
    %v50 = vld [vmem:[%s43 + $0x30] sm:$0xff]
    %v51 = vld [vmem:[%s43 + $0x38] sm:$0xff]
    %v52 = vld [vmem:[%s43 + $0x40] sm:$0xff]
    %v53 = vld [vmem:[%s43 + $0x48] sm:$0xff]
    %v54 = vld [vmem:[%s43 + $0x50] sm:$0xff]
    %v55 = vld [vmem:[%s43 + $0x58] sm:$0xff]
    %v56 = vld [vmem:[%s43 + $0x60] sm:$0xff]
    %v57 = vld [vmem:[%s43 + $0x68] sm:$0xff]
    %v58 = vld [vmem:[%s43 + $0x70] sm:$0xff]
    %v59 = vld [vmem:[%s43 + $0x78] sm:$0xff]
    %s60 = scalar_lea.vmem %s3, 256
    %v61 = vld [vmem:[%s60] sm:$0xff]
    %v62 = vld [vmem:[%s60 + $0x8] sm:$0xff]
    %v63 = vld [vmem:[%s60 + $0x10] sm:$0xff]
    %v64 = vld [vmem:[%s60 + $0x18] sm:$0xff]
    %v65 = vld [vmem:[%s60 + $0x20] sm:$0xff]
    %v66 = vld [vmem:[%s60 + $0x28] sm:$0xff]
    %v67 = vld [vmem:[%s60 + $0x30] sm:$0xff]
    %v68 = vld [vmem:[%s60 + $0x38] sm:$0xff]
    %v69 = vld [vmem:[%s60 + $0x40] sm:$0xff]
    %v70 = vld [vmem:[%s60 + $0x48] sm:$0xff]
    %v71 = vld [vmem:[%s60 + $0x50] sm:$0xff]
    %v72 = vld [vmem:[%s60 + $0x58] sm:$0xff]
    %v73 = vld [vmem:[%s60 + $0x60] sm:$0xff]
    %v74 = vld [vmem:[%s60 + $0x68] sm:$0xff]
    %v75 = vld [vmem:[%s60 + $0x70] sm:$0xff]
    %v76 = vld [vmem:[%s60 + $0x78] sm:$0xff]
    %vm77 = vcmask 261120
    %v79 = vsel %vm77, %v24, 0
    %81 = vmatprep.subr.mxu0 0.0
    %82 = vmatpush1.msra.mxu0 %v27
    %83 = vmatprep.subr.mxu0 0.0
    %84 = vmatpush1.msra.mxu0 %v28
    %85 = vmatprep.subr.mxu0 0.0
    %86 = vmatpush1.msra.mxu0 %v29
    %87 = vmatprep.subr.mxu0 0.0
    %88 = vmatpush1.msra.mxu0 %v30
    %89 = vmatprep.subr.mxu0 0.0
    %90 = vmatpush1.msra.mxu0 0.0
    %91 = vmatprep.subr.mxu0 0.0
    %92 = vmatpush1.msra.mxu0 0.0
    %93 = vmatprep.subr.mxu0 0.0
    %94 = vmatpush1.msra.mxu0 0.0
    %95 = vmatprep.subr.mxu0 0.0
    %96 = vmatpush1.msra.mxu0 0.0
    %97 = vmatprep.subr.mxu0 0.0
    %98 = vmatpush1.msra.mxu0 0.0
    %99 = vmatprep.subr.mxu0 0.0
    %100 = vmatpush1.msra.mxu0 0.0
    %101 = vmatprep.subr.mxu0 0.0
    %102 = vmatpush1.msra.mxu0 0.0
    %103 = vmatprep.subr.mxu0 0.0
    %104 = vmatpush1.msra.mxu0 0.0
    %105 = vmatprep.subr.mxu0 0.0
    %106 = vmatpush1.msra.mxu0 0.0
    %107 = vmatprep.subr.mxu0 0.0
    %108 = vmatpush1.msra.mxu0 0.0
    %109 = vmatprep.subr.mxu0 0.0
    %110 = vmatpush1.msra.mxu0 0.0
    %111 = vmatprep.subr.mxu0 0.0
    %112 = vmatpush1.msra.mxu0 0.0
    %113 = vmatprep.subr.mxu0 0.0
    %114 = vmatpush1.msra.mxu0 0.0
    %115 = vmatprep.subr.mxu0 0.0
    %116 = vmatpush1.msra.mxu0 0.0
    %117 = vmatprep.subr.mxu0 0.0
    %118 = vmatpush1.msra.mxu0 0.0
    %119 = vmatprep.subr.mxu0 0.0
    %120 = vmatpush1.msra.mxu0 0.0
    %121 = vmatprep.subr.mxu0 0.0
    %122 = vmatpush1.msra.mxu0 0.0
    %123 = vmatprep.subr.mxu0 0.0
    %124 = vmatpush1.msra.mxu0 0.0
    %125 = vmatprep.subr.mxu0 0.0
    %126 = vmatpush1.msra.mxu0 0.0
    %127 = vmatprep.subr.mxu0 0.0
    %128 = vmatpush1.msra.mxu0 0.0
    %129 = vmatprep.subr.mxu0 0.0
    %130 = vmatpush1.msra.mxu0 0.0
    %131 = vmatprep.subr.mxu0 0.0
    %132 = vmatpush1.msra.mxu0 0.0
    %133 = vmatprep.subr.mxu0 0.0
    %134 = vmatpush1.msra.mxu0 0.0
    %135 = vmatprep.subr.mxu0 0.0
    %136 = vmatpush1.msra.mxu0 0.0
    %137 = vmatprep.subr.mxu0 0.0
    %138 = vmatpush1.msra.mxu0 0.0
    %139 = vmatprep.subr.mxu0 0.0
    %140 = vmatpush1.msra.mxu0 0.0
    %141 = vmatprep.subr.mxu0 0.0
    %142 = vmatpush1.msra.mxu0 0.0
    %143 = vmatprep.subr.mxu0 0.0
    %144 = vmatpush1.msra.mxu0 0.0
    %145 = vmatprep.mubr.f32.mxu0 0.0
    %146 = vmatmul.mubr.f32.gmra.mrb[0].mxu0 %v79
    %v147 = vpop.f32.mrb[0].mxu0
    %v148 = vadd.f32 0.0, %v147
    %v149 = vpop.f32.mrb[0].mxu0
    %150 = vdwg.mxu0
    %151 = vmatprep.subr.mxu0 0.0
    %152 = vmatpush1.msra.mxu0 %v31
    %153 = vmatprep.subr.mxu0 0.0
    %154 = vmatpush1.msra.mxu0 %v32
    %155 = vmatprep.subr.mxu0 0.0
    %156 = vmatpush1.msra.mxu0 %v33
    %157 = vmatprep.subr.mxu0 0.0
    %158 = vmatpush1.msra.mxu0 %v34
    %159 = vmatprep.subr.mxu0 0.0
    %160 = vmatpush1.msra.mxu0 0.0
    %161 = vmatprep.subr.mxu0 0.0
    %162 = vmatpush1.msra.mxu0 0.0
    %163 = vmatprep.subr.mxu0 0.0
    %164 = vmatpush1.msra.mxu0 0.0
    %165 = vmatprep.subr.mxu0 0.0
    %166 = vmatpush1.msra.mxu0 0.0
    %167 = vmatprep.subr.mxu0 0.0
    %168 = vmatpush1.msra.mxu0 0.0
    %169 = vmatprep.subr.mxu0 0.0
    %170 = vmatpush1.msra.mxu0 0.0
    %171 = vmatprep.subr.mxu0 0.0
    %172 = vmatpush1.msra.mxu0 0.0
    %173 = vmatprep.subr.mxu0 0.0
    %174 = vmatpush1.msra.mxu0 0.0
    %175 = vmatprep.subr.mxu0 0.0
    %176 = vmatpush1.msra.mxu0 0.0
    %177 = vmatprep.subr.mxu0 0.0
    %178 = vmatpush1.msra.mxu0 0.0
    %179 = vmatprep.subr.mxu0 0.0
    %180 = vmatpush1.msra.mxu0 0.0
    %181 = vmatprep.subr.mxu0 0.0
    %182 = vmatpush1.msra.mxu0 0.0
    %183 = vmatprep.subr.mxu0 0.0
    %184 = vmatpush1.msra.mxu0 0.0
    %185 = vmatprep.subr.mxu0 0.0
    %186 = vmatpush1.msra.mxu0 0.0
    %187 = vmatprep.subr.mxu0 0.0
    %188 = vmatpush1.msra.mxu0 0.0
    %189 = vmatprep.subr.mxu0 0.0
    %190 = vmatpush1.msra.mxu0 0.0
    %191 = vmatprep.subr.mxu0 0.0
    %192 = vmatpush1.msra.mxu0 0.0
    %193 = vmatprep.subr.mxu0 0.0
    %194 = vmatpush1.msra.mxu0 0.0
    %195 = vmatprep.subr.mxu0 0.0
    %196 = vmatpush1.msra.mxu0 0.0
    %197 = vmatprep.subr.mxu0 0.0
    %198 = vmatpush1.msra.mxu0 0.0
    %199 = vmatprep.subr.mxu0 0.0
    %200 = vmatpush1.msra.mxu0 0.0
    %201 = vmatprep.subr.mxu0 0.0
    %202 = vmatpush1.msra.mxu0 0.0
    %203 = vmatprep.subr.mxu0 0.0
    %204 = vmatpush1.msra.mxu0 0.0
    %205 = vmatprep.subr.mxu0 0.0
    %206 = vmatpush1.msra.mxu0 0.0
    %207 = vmatprep.subr.mxu0 0.0
    %208 = vmatpush1.msra.mxu0 0.0
    %209 = vmatprep.subr.mxu0 0.0
    %210 = vmatpush1.msra.mxu0 0.0
    %211 = vmatprep.subr.mxu0 0.0
    %212 = vmatpush1.msra.mxu0 0.0
    %213 = vmatprep.subr.mxu0 0.0
    %214 = vmatpush1.msra.mxu0 0.0
    %215 = vmatprep.mubr.f32.mxu0 0.0
    %216 = vmatmul.mubr.f32.gmra.mrb[0].mxu0 %v79
    %v217 = vpop.f32.mrb[0].mxu0
    %v218 = vadd.f32 0.0, %v217
    %v219 = vpop.f32.mrb[0].mxu0
    %220 = vdwg.mxu0
    %221 = vmatprep.subr.mxu0 0.0
    %222 = vmatpush1.msra.mxu0 %v35
    %223 = vmatprep.subr.mxu0 0.0
    %224 = vmatpush1.msra.mxu0 %v36
    %225 = vmatprep.subr.mxu0 0.0
    %226 = vmatpush1.msra.mxu0 %v37
    %227 = vmatprep.subr.mxu0 0.0
    %228 = vmatpush1.msra.mxu0 %v38
    %229 = vmatprep.subr.mxu0 0.0
    %230 = vmatpush1.msra.mxu0 0.0
    %231 = vmatprep.subr.mxu0 0.0
    %232 = vmatpush1.msra.mxu0 0.0
    %233 = vmatprep.subr.mxu0 0.0
    %234 = vmatpush1.msra.mxu0 0.0
    %235 = vmatprep.subr.mxu0 0.0
    %236 = vmatpush1.msra.mxu0 0.0
    %237 = vmatprep.subr.mxu0 0.0
    %238 = vmatpush1.msra.mxu0 0.0
    %239 = vmatprep.subr.mxu0 0.0
    %240 = vmatpush1.msra.mxu0 0.0
    %241 = vmatprep.subr.mxu0 0.0
    %242 = vmatpush1.msra.mxu0 0.0
    %243 = vmatprep.subr.mxu0 0.0
    %244 = vmatpush1.msra.mxu0 0.0
    %245 = vmatprep.subr.mxu0 0.0
    %246 = vmatpush1.msra.mxu0 0.0
    %247 = vmatprep.subr.mxu0 0.0
    %248 = vmatpush1.msra.mxu0 0.0
    %249 = vmatprep.subr.mxu0 0.0
    %250 = vmatpush1.msra.mxu0 0.0
    %251 = vmatprep.subr.mxu0 0.0
    %252 = vmatpush1.msra.mxu0 0.0
    %253 = vmatprep.subr.mxu0 0.0
    %254 = vmatpush1.msra.mxu0 0.0
    %255 = vmatprep.subr.mxu0 0.0
    %256 = vmatpush1.msra.mxu0 0.0
    %257 = vmatprep.subr.mxu0 0.0
    %258 = vmatpush1.msra.mxu0 0.0
    %259 = vmatprep.subr.mxu0 0.0
    %260 = vmatpush1.msra.mxu0 0.0
    %261 = vmatprep.subr.mxu0 0.0
    %262 = vmatpush1.msra.mxu0 0.0
    %263 = vmatprep.subr.mxu0 0.0
    %264 = vmatpush1.msra.mxu0 0.0
    %265 = vmatprep.subr.mxu0 0.0
    %266 = vmatpush1.msra.mxu0 0.0
    %267 = vmatprep.subr.mxu0 0.0
    %268 = vmatpush1.msra.mxu0 0.0
    %269 = vmatprep.subr.mxu0 0.0
    %270 = vmatpush1.msra.mxu0 0.0
    %271 = vmatprep.subr.mxu0 0.0
    %272 = vmatpush1.msra.mxu0 0.0
    %273 = vmatprep.subr.mxu0 0.0
    %274 = vmatpush1.msra.mxu0 0.0
    %275 = vmatprep.subr.mxu0 0.0
    %276 = vmatpush1.msra.mxu0 0.0
    %277 = vmatprep.subr.mxu0 0.0
    %278 = vmatpush1.msra.mxu0 0.0
    %279 = vmatprep.subr.mxu0 0.0
    %280 = vmatpush1.msra.mxu0 0.0
    %281 = vmatprep.subr.mxu0 0.0
    %282 = vmatpush1.msra.mxu0 0.0
    %283 = vmatprep.subr.mxu0 0.0
    %284 = vmatpush1.msra.mxu0 0.0
    %285 = vmatprep.mubr.f32.mxu0 0.0
    %286 = vmatmul.mubr.f32.gmra.mrb[0].mxu0 %v79
    %v287 = vpop.f32.mrb[0].mxu0
    %v288 = vadd.f32 0.0, %v287
    %v289 = vpop.f32.mrb[0].mxu0
    %290 = vdwg.mxu0
    %291 = vmatprep.subr.mxu0 0.0
    %292 = vmatpush1.msra.mxu0 %v39
    %293 = vmatprep.subr.mxu0 0.0
    %294 = vmatpush1.msra.mxu0 %v40
    %295 = vmatprep.subr.mxu0 0.0
    %296 = vmatpush1.msra.mxu0 %v41
    %297 = vmatprep.subr.mxu0 0.0
    %298 = vmatpush1.msra.mxu0 %v42
    %299 = vmatprep.subr.mxu0 0.0
    %300 = vmatpush1.msra.mxu0 0.0
    %301 = vmatprep.subr.mxu0 0.0
    %302 = vmatpush1.msra.mxu0 0.0
    %303 = vmatprep.subr.mxu0 0.0
    %304 = vmatpush1.msra.mxu0 0.0
    %305 = vmatprep.subr.mxu0 0.0
    %306 = vmatpush1.msra.mxu0 0.0
    %307 = vmatprep.subr.mxu0 0.0
    %308 = vmatpush1.msra.mxu0 0.0
    %309 = vmatprep.subr.mxu0 0.0
    %310 = vmatpush1.msra.mxu0 0.0
    %311 = vmatprep.subr.mxu0 0.0
    %312 = vmatpush1.msra.mxu0 0.0
    %313 = vmatprep.subr.mxu0 0.0
    %314 = vmatpush1.msra.mxu0 0.0
    %315 = vmatprep.subr.mxu0 0.0
    %316 = vmatpush1.msra.mxu0 0.0
    %317 = vmatprep.subr.mxu0 0.0
    %318 = vmatpush1.msra.mxu0 0.0
    %319 = vmatprep.subr.mxu0 0.0
    %320 = vmatpush1.msra.mxu0 0.0
    %321 = vmatprep.subr.mxu0 0.0
    %322 = vmatpush1.msra.mxu0 0.0
    %323 = vmatprep.subr.mxu0 0.0
    %324 = vmatpush1.msra.mxu0 0.0
    %325 = vmatprep.subr.mxu0 0.0
    %326 = vmatpush1.msra.mxu0 0.0
    %327 = vmatprep.subr.mxu0 0.0
    %328 = vmatpush1.msra.mxu0 0.0
    %329 = vmatprep.subr.mxu0 0.0
    %330 = vmatpush1.msra.mxu0 0.0
    %331 = vmatprep.subr.mxu0 0.0
    %332 = vmatpush1.msra.mxu0 0.0
    %333 = vmatprep.subr.mxu0 0.0
    %334 = vmatpush1.msra.mxu0 0.0
    %335 = vmatprep.subr.mxu0 0.0
    %336 = vmatpush1.msra.mxu0 0.0
    %337 = vmatprep.subr.mxu0 0.0
    %338 = vmatpush1.msra.mxu0 0.0
    %339 = vmatprep.subr.mxu0 0.0
    %340 = vmatpush1.msra.mxu0 0.0
    %341 = vmatprep.subr.mxu0 0.0
    %342 = vmatpush1.msra.mxu0 0.0
    %343 = vmatprep.subr.mxu0 0.0
    %344 = vmatpush1.msra.mxu0 0.0
    %345 = vmatprep.subr.mxu0 0.0
    %346 = vmatpush1.msra.mxu0 0.0
    %347 = vmatprep.subr.mxu0 0.0
    %348 = vmatpush1.msra.mxu0 0.0
    %349 = vmatprep.subr.mxu0 0.0
    %350 = vmatpush1.msra.mxu0 0.0
    %351 = vmatprep.subr.mxu0 0.0
    %352 = vmatpush1.msra.mxu0 0.0
    %353 = vmatprep.subr.mxu0 0.0
    %354 = vmatpush1.msra.mxu0 0.0
    %355 = vmatprep.mubr.f32.mxu0 0.0
    %356 = vmatmul.mubr.f32.gmra.mrb[0].mxu0 %v79
    %v357 = vpop.f32.mrb[0].mxu0
    %v358 = vadd.f32 0.0, %v357
    %v359 = vpop.f32.mrb[0].mxu0
    %360 = vdwg.mxu0
    %v362 = vsel %vm77, %v25, 0
    %364 = vmatprep.subr.mxu0 0.0
    %365 = vmatpush1.msra.mxu0 %v44
    %366 = vmatprep.subr.mxu0 0.0
    %367 = vmatpush1.msra.mxu0 %v45
    %368 = vmatprep.subr.mxu0 0.0
    %369 = vmatpush1.msra.mxu0 %v46
    %370 = vmatprep.subr.mxu0 0.0
    %371 = vmatpush1.msra.mxu0 %v47
    %372 = vmatprep.subr.mxu0 0.0
    %373 = vmatpush1.msra.mxu0 0.0
    %374 = vmatprep.subr.mxu0 0.0
    %375 = vmatpush1.msra.mxu0 0.0
    %376 = vmatprep.subr.mxu0 0.0
    %377 = vmatpush1.msra.mxu0 0.0
    %378 = vmatprep.subr.mxu0 0.0
    %379 = vmatpush1.msra.mxu0 0.0
    %380 = vmatprep.subr.mxu0 0.0
    %381 = vmatpush1.msra.mxu0 0.0
    %382 = vmatprep.subr.mxu0 0.0
    %383 = vmatpush1.msra.mxu0 0.0
    %384 = vmatprep.subr.mxu0 0.0
    %385 = vmatpush1.msra.mxu0 0.0
    %386 = vmatprep.subr.mxu0 0.0
    %387 = vmatpush1.msra.mxu0 0.0
    %388 = vmatprep.subr.mxu0 0.0
    %389 = vmatpush1.msra.mxu0 0.0
    %390 = vmatprep.subr.mxu0 0.0
    %391 = vmatpush1.msra.mxu0 0.0
    %392 = vmatprep.subr.mxu0 0.0
    %393 = vmatpush1.msra.mxu0 0.0
    %394 = vmatprep.subr.mxu0 0.0
    %395 = vmatpush1.msra.mxu0 0.0
    %396 = vmatprep.subr.mxu0 0.0
    %397 = vmatpush1.msra.mxu0 0.0
    %398 = vmatprep.subr.mxu0 0.0
    %399 = vmatpush1.msra.mxu0 0.0
    %400 = vmatprep.subr.mxu0 0.0
    %401 = vmatpush1.msra.mxu0 0.0
    %402 = vmatprep.subr.mxu0 0.0
    %403 = vmatpush1.msra.mxu0 0.0
    %404 = vmatprep.subr.mxu0 0.0
    %405 = vmatpush1.msra.mxu0 0.0
    %406 = vmatprep.subr.mxu0 0.0
    %407 = vmatpush1.msra.mxu0 0.0
    %408 = vmatprep.subr.mxu0 0.0
    %409 = vmatpush1.msra.mxu0 0.0
    %410 = vmatprep.subr.mxu0 0.0
    %411 = vmatpush1.msra.mxu0 0.0
    %412 = vmatprep.subr.mxu0 0.0
    %413 = vmatpush1.msra.mxu0 0.0
    %414 = vmatprep.subr.mxu0 0.0
    %415 = vmatpush1.msra.mxu0 0.0
    %416 = vmatprep.subr.mxu0 0.0
    %417 = vmatpush1.msra.mxu0 0.0
    %418 = vmatprep.subr.mxu0 0.0
    %419 = vmatpush1.msra.mxu0 0.0
    %420 = vmatprep.subr.mxu0 0.0
    %421 = vmatpush1.msra.mxu0 0.0
    %422 = vmatprep.subr.mxu0 0.0
    %423 = vmatpush1.msra.mxu0 0.0
    %424 = vmatprep.subr.mxu0 0.0
    %425 = vmatpush1.msra.mxu0 0.0
    %426 = vmatprep.subr.mxu0 0.0
    %427 = vmatpush1.msra.mxu0 0.0
    %428 = vmatprep.mubr.f32.mxu0 0.0
    %429 = vmatmul.mubr.f32.gmra.mrb[0].mxu0 %v362
    %v430 = vpop.f32.mrb[0].mxu0
    %v431 = vadd.f32 0.0, %v430
    %v432 = vpop.f32.mrb[0].mxu0
    %433 = vdwg.mxu0
    %434 = vmatprep.subr.mxu0 0.0
    %435 = vmatpush1.msra.mxu0 %v48
    %436 = vmatprep.subr.mxu0 0.0
    %437 = vmatpush1.msra.mxu0 %v49
    %438 = vmatprep.subr.mxu0 0.0
    %439 = vmatpush1.msra.mxu0 %v50
    %440 = vmatprep.subr.mxu0 0.0
    %441 = vmatpush1.msra.mxu0 %v51
    %442 = vmatprep.subr.mxu0 0.0
    %443 = vmatpush1.msra.mxu0 0.0
    %444 = vmatprep.subr.mxu0 0.0
    %445 = vmatpush1.msra.mxu0 0.0
    %446 = vmatprep.subr.mxu0 0.0
    %447 = vmatpush1.msra.mxu0 0.0
    %448 = vmatprep.subr.mxu0 0.0
    %449 = vmatpush1.msra.mxu0 0.0
    %450 = vmatprep.subr.mxu0 0.0
    %451 = vmatpush1.msra.mxu0 0.0
    %452 = vmatprep.subr.mxu0 0.0
    %453 = vmatpush1.msra.mxu0 0.0
    %454 = vmatprep.subr.mxu0 0.0
    %455 = vmatpush1.msra.mxu0 0.0
    %456 = vmatprep.subr.mxu0 0.0
    %457 = vmatpush1.msra.mxu0 0.0
    %458 = vmatprep.subr.mxu0 0.0
    %459 = vmatpush1.msra.mxu0 0.0
    %460 = vmatprep.subr.mxu0 0.0
    %461 = vmatpush1.msra.mxu0 0.0
    %462 = vmatprep.subr.mxu0 0.0
    %463 = vmatpush1.msra.mxu0 0.0
    %464 = vmatprep.subr.mxu0 0.0
    %465 = vmatpush1.msra.mxu0 0.0
    %466 = vmatprep.subr.mxu0 0.0
    %467 = vmatpush1.msra.mxu0 0.0
    %468 = vmatprep.subr.mxu0 0.0
    %469 = vmatpush1.msra.mxu0 0.0
    %470 = vmatprep.subr.mxu0 0.0
    %471 = vmatpush1.msra.mxu0 0.0
    %472 = vmatprep.subr.mxu0 0.0
    %473 = vmatpush1.msra.mxu0 0.0
    %474 = vmatprep.subr.mxu0 0.0
    %475 = vmatpush1.msra.mxu0 0.0
    %476 = vmatprep.subr.mxu0 0.0
    %477 = vmatpush1.msra.mxu0 0.0
    %478 = vmatprep.subr.mxu0 0.0
    %479 = vmatpush1.msra.mxu0 0.0
    %480 = vmatprep.subr.mxu0 0.0
    %481 = vmatpush1.msra.mxu0 0.0
    %482 = vmatprep.subr.mxu0 0.0
    %483 = vmatpush1.msra.mxu0 0.0
    %484 = vmatprep.subr.mxu0 0.0
    %485 = vmatpush1.msra.mxu0 0.0
    %486 = vmatprep.subr.mxu0 0.0
    %487 = vmatpush1.msra.mxu0 0.0
    %488 = vmatprep.subr.mxu0 0.0
    %489 = vmatpush1.msra.mxu0 0.0
    %490 = vmatprep.subr.mxu0 0.0
    %491 = vmatpush1.msra.mxu0 0.0
    %492 = vmatprep.subr.mxu0 0.0
    %493 = vmatpush1.msra.mxu0 0.0
    %494 = vmatprep.subr.mxu0 0.0
    %495 = vmatpush1.msra.mxu0 0.0
    %496 = vmatprep.subr.mxu0 0.0
    %497 = vmatpush1.msra.mxu0 0.0
    %498 = vmatprep.mubr.f32.mxu0 0.0
    %499 = vmatmul.mubr.f32.gmra.mrb[0].mxu0 %v362
    %v500 = vpop.f32.mrb[0].mxu0
    %v501 = vadd.f32 0.0, %v500
    %v502 = vpop.f32.mrb[0].mxu0
    %503 = vdwg.mxu0
    %504 = vmatprep.subr.mxu0 0.0
    %505 = vmatpush1.msra.mxu0 %v52
    %506 = vmatprep.subr.mxu0 0.0
    %507 = vmatpush1.msra.mxu0 %v53
    %508 = vmatprep.subr.mxu0 0.0
    %509 = vmatpush1.msra.mxu0 %v54
    %510 = vmatprep.subr.mxu0 0.0
    %511 = vmatpush1.msra.mxu0 %v55
    %512 = vmatprep.subr.mxu0 0.0
    %513 = vmatpush1.msra.mxu0 0.0
    %514 = vmatprep.subr.mxu0 0.0
    %515 = vmatpush1.msra.mxu0 0.0
    %516 = vmatprep.subr.mxu0 0.0
    %517 = vmatpush1.msra.mxu0 0.0
    %518 = vmatprep.subr.mxu0 0.0
    %519 = vmatpush1.msra.mxu0 0.0
    %520 = vmatprep.subr.mxu0 0.0
    %521 = vmatpush1.msra.mxu0 0.0
    %522 = vmatprep.subr.mxu0 0.0
    %523 = vmatpush1.msra.mxu0 0.0
    %524 = vmatprep.subr.mxu0 0.0
    %525 = vmatpush1.msra.mxu0 0.0
    %526 = vmatprep.subr.mxu0 0.0
    %527 = vmatpush1.msra.mxu0 0.0
    %528 = vmatprep.subr.mxu0 0.0
    %529 = vmatpush1.msra.mxu0 0.0
    %530 = vmatprep.subr.mxu0 0.0
    %531 = vmatpush1.msra.mxu0 0.0
    %532 = vmatprep.subr.mxu0 0.0
    %533 = vmatpush1.msra.mxu0 0.0
    %534 = vmatprep.subr.mxu0 0.0
    %535 = vmatpush1.msra.mxu0 0.0
    %536 = vmatprep.subr.mxu0 0.0
    %537 = vmatpush1.msra.mxu0 0.0
    %538 = vmatprep.subr.mxu0 0.0
    %539 = vmatpush1.msra.mxu0 0.0
    %540 = vmatprep.subr.mxu0 0.0
    %541 = vmatpush1.msra.mxu0 0.0
    %542 = vmatprep.subr.mxu0 0.0
    %543 = vmatpush1.msra.mxu0 0.0
    %544 = vmatprep.subr.mxu0 0.0
    %545 = vmatpush1.msra.mxu0 0.0
    %546 = vmatprep.subr.mxu0 0.0
    %547 = vmatpush1.msra.mxu0 0.0
    %548 = vmatprep.subr.mxu0 0.0
    %549 = vmatpush1.msra.mxu0 0.0
    %550 = vmatprep.subr.mxu0 0.0
    %551 = vmatpush1.msra.mxu0 0.0
    %552 = vmatprep.subr.mxu0 0.0
    %553 = vmatpush1.msra.mxu0 0.0
    %554 = vmatprep.subr.mxu0 0.0
    %555 = vmatpush1.msra.mxu0 0.0
    %556 = vmatprep.subr.mxu0 0.0
    %557 = vmatpush1.msra.mxu0 0.0
    %558 = vmatprep.subr.mxu0 0.0
    %559 = vmatpush1.msra.mxu0 0.0
    %560 = vmatprep.subr.mxu0 0.0
    %561 = vmatpush1.msra.mxu0 0.0
    %562 = vmatprep.subr.mxu0 0.0
    %563 = vmatpush1.msra.mxu0 0.0
    %564 = vmatprep.subr.mxu0 0.0
    %565 = vmatpush1.msra.mxu0 0.0
    %566 = vmatprep.subr.mxu0 0.0
    %567 = vmatpush1.msra.mxu0 0.0
    %568 = vmatprep.mubr.f32.mxu0 0.0
    %569 = vmatmul.mubr.f32.gmra.mrb[0].mxu0 %v362
    %v570 = vpop.f32.mrb[0].mxu0
    %v571 = vadd.f32 0.0, %v570
    %v572 = vpop.f32.mrb[0].mxu0
    %573 = vdwg.mxu0
    %574 = vmatprep.subr.mxu0 0.0
    %575 = vmatpush1.msra.mxu0 %v56
    %576 = vmatprep.subr.mxu0 0.0
    %577 = vmatpush1.msra.mxu0 %v57
    %578 = vmatprep.subr.mxu0 0.0
    %579 = vmatpush1.msra.mxu0 %v58
    %580 = vmatprep.subr.mxu0 0.0
    %581 = vmatpush1.msra.mxu0 %v59
    %582 = vmatprep.subr.mxu0 0.0
    %583 = vmatpush1.msra.mxu0 0.0
    %584 = vmatprep.subr.mxu0 0.0
    %585 = vmatpush1.msra.mxu0 0.0
    %586 = vmatprep.subr.mxu0 0.0
    %587 = vmatpush1.msra.mxu0 0.0
    %588 = vmatprep.subr.mxu0 0.0
    %589 = vmatpush1.msra.mxu0 0.0
    %590 = vmatprep.subr.mxu0 0.0
    %591 = vmatpush1.msra.mxu0 0.0
    %592 = vmatprep.subr.mxu0 0.0
    %593 = vmatpush1.msra.mxu0 0.0
    %594 = vmatprep.subr.mxu0 0.0
    %595 = vmatpush1.msra.mxu0 0.0
    %596 = vmatprep.subr.mxu0 0.0
    %597 = vmatpush1.msra.mxu0 0.0
    %598 = vmatprep.subr.mxu0 0.0
    %599 = vmatpush1.msra.mxu0 0.0
    %600 = vmatprep.subr.mxu0 0.0
    %601 = vmatpush1.msra.mxu0 0.0
    %602 = vmatprep.subr.mxu0 0.0
    %603 = vmatpush1.msra.mxu0 0.0
    %604 = vmatprep.subr.mxu0 0.0
    %605 = vmatpush1.msra.mxu0 0.0
    %606 = vmatprep.subr.mxu0 0.0
    %607 = vmatpush1.msra.mxu0 0.0
    %608 = vmatprep.subr.mxu0 0.0
    %609 = vmatpush1.msra.mxu0 0.0
    %610 = vmatprep.subr.mxu0 0.0
    %611 = vmatpush1.msra.mxu0 0.0
    %612 = vmatprep.subr.mxu0 0.0
    %613 = vmatpush1.msra.mxu0 0.0
    %614 = vmatprep.subr.mxu0 0.0
    %615 = vmatpush1.msra.mxu0 0.0
    %616 = vmatprep.subr.mxu0 0.0
    %617 = vmatpush1.msra.mxu0 0.0
    %618 = vmatprep.subr.mxu0 0.0
    %619 = vmatpush1.msra.mxu0 0.0
    %620 = vmatprep.subr.mxu0 0.0
    %621 = vmatpush1.msra.mxu0 0.0
    %622 = vmatprep.subr.mxu0 0.0
    %623 = vmatpush1.msra.mxu0 0.0
    %624 = vmatprep.subr.mxu0 0.0
    %625 = vmatpush1.msra.mxu0 0.0
    %626 = vmatprep.subr.mxu0 0.0
    %627 = vmatpush1.msra.mxu0 0.0
    %628 = vmatprep.subr.mxu0 0.0
    %629 = vmatpush1.msra.mxu0 0.0
    %630 = vmatprep.subr.mxu0 0.0
    %631 = vmatpush1.msra.mxu0 0.0
    %632 = vmatprep.subr.mxu0 0.0
    %633 = vmatpush1.msra.mxu0 0.0
    %634 = vmatprep.subr.mxu0 0.0
    %635 = vmatpush1.msra.mxu0 0.0
    %636 = vmatprep.subr.mxu0 0.0
    %637 = vmatpush1.msra.mxu0 0.0
    %638 = vmatprep.mubr.f32.mxu0 0.0
    %639 = vmatmul.mubr.f32.gmra.mrb[0].mxu0 %v362
    %v640 = vpop.f32.mrb[0].mxu0
    %v641 = vadd.f32 0.0, %v640
    %v642 = vpop.f32.mrb[0].mxu0
    %643 = vdwg.mxu0
    %v645 = vsel %vm77, %v26, 0
    %647 = vmatprep.subr.mxu0 0.0
    %648 = vmatpush1.msra.mxu0 %v61
    %649 = vmatprep.subr.mxu0 0.0
    %650 = vmatpush1.msra.mxu0 %v62
    %651 = vmatprep.subr.mxu0 0.0
    %652 = vmatpush1.msra.mxu0 %v63
    %653 = vmatprep.subr.mxu0 0.0
    %654 = vmatpush1.msra.mxu0 %v64
    %655 = vmatprep.subr.mxu0 0.0
    %656 = vmatpush1.msra.mxu0 0.0
    %657 = vmatprep.subr.mxu0 0.0
    %658 = vmatpush1.msra.mxu0 0.0
    %659 = vmatprep.subr.mxu0 0.0
    %660 = vmatpush1.msra.mxu0 0.0
    %661 = vmatprep.subr.mxu0 0.0
    %662 = vmatpush1.msra.mxu0 0.0
    %663 = vmatprep.subr.mxu0 0.0
    %664 = vmatpush1.msra.mxu0 0.0
    %665 = vmatprep.subr.mxu0 0.0
    %666 = vmatpush1.msra.mxu0 0.0
    %667 = vmatprep.subr.mxu0 0.0
    %668 = vmatpush1.msra.mxu0 0.0
    %669 = vmatprep.subr.mxu0 0.0
    %670 = vmatpush1.msra.mxu0 0.0
    %671 = vmatprep.subr.mxu0 0.0
    %672 = vmatpush1.msra.mxu0 0.0
    %673 = vmatprep.subr.mxu0 0.0
    %674 = vmatpush1.msra.mxu0 0.0
    %675 = vmatprep.subr.mxu0 0.0
    %676 = vmatpush1.msra.mxu0 0.0
    %677 = vmatprep.subr.mxu0 0.0
    %678 = vmatpush1.msra.mxu0 0.0
    %679 = vmatprep.subr.mxu0 0.0
    %680 = vmatpush1.msra.mxu0 0.0
    %681 = vmatprep.subr.mxu0 0.0
    %682 = vmatpush1.msra.mxu0 0.0
    %683 = vmatprep.subr.mxu0 0.0
    %684 = vmatpush1.msra.mxu0 0.0
    %685 = vmatprep.subr.mxu0 0.0
    %686 = vmatpush1.msra.mxu0 0.0
    %687 = vmatprep.subr.mxu0 0.0
    %688 = vmatpush1.msra.mxu0 0.0
    %689 = vmatprep.subr.mxu0 0.0
    %690 = vmatpush1.msra.mxu0 0.0
    %691 = vmatprep.subr.mxu0 0.0
    %692 = vmatpush1.msra.mxu0 0.0
    %693 = vmatprep.subr.mxu0 0.0
    %694 = vmatpush1.msra.mxu0 0.0
    %695 = vmatprep.subr.mxu0 0.0
    %696 = vmatpush1.msra.mxu0 0.0
    %697 = vmatprep.subr.mxu0 0.0
    %698 = vmatpush1.msra.mxu0 0.0
    %699 = vmatprep.subr.mxu0 0.0
    %700 = vmatpush1.msra.mxu0 0.0
    %701 = vmatprep.subr.mxu0 0.0
    %702 = vmatpush1.msra.mxu0 0.0
    %703 = vmatprep.subr.mxu0 0.0
    %704 = vmatpush1.msra.mxu0 0.0
    %705 = vmatprep.subr.mxu0 0.0
    %706 = vmatpush1.msra.mxu0 0.0
    %707 = vmatprep.subr.mxu0 0.0
    %708 = vmatpush1.msra.mxu0 0.0
    %709 = vmatprep.subr.mxu0 0.0
    %710 = vmatpush1.msra.mxu0 0.0
    %711 = vmatprep.mubr.f32.mxu0 0.0
    %712 = vmatmul.mubr.f32.gmra.mrb[0].mxu0 %v645
    %v713 = vpop.f32.mrb[0].mxu0
    %v714 = vadd.f32 0.0, %v713
    %v715 = vpop.f32.mrb[0].mxu0
    %716 = vdwg.mxu0
    %717 = vmatprep.subr.mxu0 0.0
    %718 = vmatpush1.msra.mxu0 %v65
    %719 = vmatprep.subr.mxu0 0.0
    %720 = vmatpush1.msra.mxu0 %v66
    %721 = vmatprep.subr.mxu0 0.0
    %722 = vmatpush1.msra.mxu0 %v67
    %723 = vmatprep.subr.mxu0 0.0
    %724 = vmatpush1.msra.mxu0 %v68
    %725 = vmatprep.subr.mxu0 0.0
    %726 = vmatpush1.msra.mxu0 0.0
    %727 = vmatprep.subr.mxu0 0.0
    %728 = vmatpush1.msra.mxu0 0.0
    %729 = vmatprep.subr.mxu0 0.0
    %730 = vmatpush1.msra.mxu0 0.0
    %731 = vmatprep.subr.mxu0 0.0
    %732 = vmatpush1.msra.mxu0 0.0
    %733 = vmatprep.subr.mxu0 0.0
    %734 = vmatpush1.msra.mxu0 0.0
    %735 = vmatprep.subr.mxu0 0.0
    %736 = vmatpush1.msra.mxu0 0.0
    %737 = vmatprep.subr.mxu0 0.0
    %738 = vmatpush1.msra.mxu0 0.0
    %739 = vmatprep.subr.mxu0 0.0
    %740 = vmatpush1.msra.mxu0 0.0
    %741 = vmatprep.subr.mxu0 0.0
    %742 = vmatpush1.msra.mxu0 0.0
    %743 = vmatprep.subr.mxu0 0.0
    %744 = vmatpush1.msra.mxu0 0.0
    %745 = vmatprep.subr.mxu0 0.0
    %746 = vmatpush1.msra.mxu0 0.0
    %747 = vmatprep.subr.mxu0 0.0
    %748 = vmatpush1.msra.mxu0 0.0
    %749 = vmatprep.subr.mxu0 0.0
    %750 = vmatpush1.msra.mxu0 0.0
    %751 = vmatprep.subr.mxu0 0.0
    %752 = vmatpush1.msra.mxu0 0.0
    %753 = vmatprep.subr.mxu0 0.0
    %754 = vmatpush1.msra.mxu0 0.0
    %755 = vmatprep.subr.mxu0 0.0
    %756 = vmatpush1.msra.mxu0 0.0
    %757 = vmatprep.subr.mxu0 0.0
    %758 = vmatpush1.msra.mxu0 0.0
    %759 = vmatprep.subr.mxu0 0.0
    %760 = vmatpush1.msra.mxu0 0.0
    %761 = vmatprep.subr.mxu0 0.0
    %762 = vmatpush1.msra.mxu0 0.0
    %763 = vmatprep.subr.mxu0 0.0
    %764 = vmatpush1.msra.mxu0 0.0
    %765 = vmatprep.subr.mxu0 0.0
    %766 = vmatpush1.msra.mxu0 0.0
    %767 = vmatprep.subr.mxu0 0.0
    %768 = vmatpush1.msra.mxu0 0.0
    %769 = vmatprep.subr.mxu0 0.0
    %770 = vmatpush1.msra.mxu0 0.0
    %771 = vmatprep.subr.mxu0 0.0
    %772 = vmatpush1.msra.mxu0 0.0
    %773 = vmatprep.subr.mxu0 0.0
    %774 = vmatpush1.msra.mxu0 0.0
    %775 = vmatprep.subr.mxu0 0.0
    %776 = vmatpush1.msra.mxu0 0.0
    %777 = vmatprep.subr.mxu0 0.0
    %778 = vmatpush1.msra.mxu0 0.0
    %779 = vmatprep.subr.mxu0 0.0
    %780 = vmatpush1.msra.mxu0 0.0
    %781 = vmatprep.mubr.f32.mxu0 0.0
    %782 = vmatmul.mubr.f32.gmra.mrb[0].mxu0 %v645
    %v783 = vpop.f32.mrb[0].mxu0
    %v784 = vadd.f32 0.0, %v783
    %v785 = vpop.f32.mrb[0].mxu0
    %786 = vdwg.mxu0
    %787 = vmatprep.subr.mxu0 0.0
    %788 = vmatpush1.msra.mxu0 %v69
    %789 = vmatprep.subr.mxu0 0.0
    %790 = vmatpush1.msra.mxu0 %v70
    %791 = vmatprep.subr.mxu0 0.0
    %792 = vmatpush1.msra.mxu0 %v71
    %793 = vmatprep.subr.mxu0 0.0
    %794 = vmatpush1.msra.mxu0 %v72
    %795 = vmatprep.subr.mxu0 0.0
    %796 = vmatpush1.msra.mxu0 0.0
    %797 = vmatprep.subr.mxu0 0.0
    %798 = vmatpush1.msra.mxu0 0.0
    %799 = vmatprep.subr.mxu0 0.0
    %800 = vmatpush1.msra.mxu0 0.0
    %801 = vmatprep.subr.mxu0 0.0
    %802 = vmatpush1.msra.mxu0 0.0
    %803 = vmatprep.subr.mxu0 0.0
    %804 = vmatpush1.msra.mxu0 0.0
    %805 = vmatprep.subr.mxu0 0.0
    %806 = vmatpush1.msra.mxu0 0.0
    %807 = vmatprep.subr.mxu0 0.0
    %808 = vmatpush1.msra.mxu0 0.0
    %809 = vmatprep.subr.mxu0 0.0
    %810 = vmatpush1.msra.mxu0 0.0
    %811 = vmatprep.subr.mxu0 0.0
    %812 = vmatpush1.msra.mxu0 0.0
    %813 = vmatprep.subr.mxu0 0.0
    %814 = vmatpush1.msra.mxu0 0.0
    %815 = vmatprep.subr.mxu0 0.0
    %816 = vmatpush1.msra.mxu0 0.0
    %817 = vmatprep.subr.mxu0 0.0
    %818 = vmatpush1.msra.mxu0 0.0
    %819 = vmatprep.subr.mxu0 0.0
    %820 = vmatpush1.msra.mxu0 0.0
    %821 = vmatprep.subr.mxu0 0.0
    %822 = vmatpush1.msra.mxu0 0.0
    %823 = vmatprep.subr.mxu0 0.0
    %824 = vmatpush1.msra.mxu0 0.0
    %825 = vmatprep.subr.mxu0 0.0
    %826 = vmatpush1.msra.mxu0 0.0
    %827 = vmatprep.subr.mxu0 0.0
    %828 = vmatpush1.msra.mxu0 0.0
    %829 = vmatprep.subr.mxu0 0.0
    %830 = vmatpush1.msra.mxu0 0.0
    %831 = vmatprep.subr.mxu0 0.0
    %832 = vmatpush1.msra.mxu0 0.0
    %833 = vmatprep.subr.mxu0 0.0
    %834 = vmatpush1.msra.mxu0 0.0
    %835 = vmatprep.subr.mxu0 0.0
    %836 = vmatpush1.msra.mxu0 0.0
    %837 = vmatprep.subr.mxu0 0.0
    %838 = vmatpush1.msra.mxu0 0.0
    %839 = vmatprep.subr.mxu0 0.0
    %840 = vmatpush1.msra.mxu0 0.0
    %841 = vmatprep.subr.mxu0 0.0
    %842 = vmatpush1.msra.mxu0 0.0
    %843 = vmatprep.subr.mxu0 0.0
    %844 = vmatpush1.msra.mxu0 0.0
    %845 = vmatprep.subr.mxu0 0.0
    %846 = vmatpush1.msra.mxu0 0.0
    %847 = vmatprep.subr.mxu0 0.0
    %848 = vmatpush1.msra.mxu0 0.0
    %849 = vmatprep.subr.mxu0 0.0
    %850 = vmatpush1.msra.mxu0 0.0
    %851 = vmatprep.mubr.f32.mxu0 0.0
    %852 = vmatmul.mubr.f32.gmra.mrb[0].mxu0 %v645
    %v853 = vpop.f32.mrb[0].mxu0
    %v854 = vadd.f32 0.0, %v853
    %v855 = vpop.f32.mrb[0].mxu0
    %856 = vdwg.mxu0
    %857 = vmatprep.subr.mxu0 0.0
    %858 = vmatpush1.msra.mxu0 %v73
    %859 = vmatprep.subr.mxu0 0.0
    %860 = vmatpush1.msra.mxu0 %v74
    %861 = vmatprep.subr.mxu0 0.0
    %862 = vmatpush1.msra.mxu0 %v75
    %863 = vmatprep.subr.mxu0 0.0
    %864 = vmatpush1.msra.mxu0 %v76
    %865 = vmatprep.subr.mxu0 0.0
    %866 = vmatpush1.msra.mxu0 0.0
    %867 = vmatprep.subr.mxu0 0.0
    %868 = vmatpush1.msra.mxu0 0.0
    %869 = vmatprep.subr.mxu0 0.0
    %870 = vmatpush1.msra.mxu0 0.0
    %871 = vmatprep.subr.mxu0 0.0
    %872 = vmatpush1.msra.mxu0 0.0
    %873 = vmatprep.subr.mxu0 0.0
    %874 = vmatpush1.msra.mxu0 0.0
    %875 = vmatprep.subr.mxu0 0.0
    %876 = vmatpush1.msra.mxu0 0.0
    %877 = vmatprep.subr.mxu0 0.0
    %878 = vmatpush1.msra.mxu0 0.0
    %879 = vmatprep.subr.mxu0 0.0
    %880 = vmatpush1.msra.mxu0 0.0
    %881 = vmatprep.subr.mxu0 0.0
    %882 = vmatpush1.msra.mxu0 0.0
    %883 = vmatprep.subr.mxu0 0.0
    %884 = vmatpush1.msra.mxu0 0.0
    %885 = vmatprep.subr.mxu0 0.0
    %886 = vmatpush1.msra.mxu0 0.0
    %887 = vmatprep.subr.mxu0 0.0
    %888 = vmatpush1.msra.mxu0 0.0
    %889 = vmatprep.subr.mxu0 0.0
    %890 = vmatpush1.msra.mxu0 0.0
    %891 = vmatprep.subr.mxu0 0.0
    %892 = vmatpush1.msra.mxu0 0.0
    %893 = vmatprep.subr.mxu0 0.0
    %894 = vmatpush1.msra.mxu0 0.0
    %895 = vmatprep.subr.mxu0 0.0
    %896 = vmatpush1.msra.mxu0 0.0
    %897 = vmatprep.subr.mxu0 0.0
    %898 = vmatpush1.msra.mxu0 0.0
    %899 = vmatprep.subr.mxu0 0.0
    %900 = vmatpush1.msra.mxu0 0.0
    %901 = vmatprep.subr.mxu0 0.0
    %902 = vmatpush1.msra.mxu0 0.0
    %903 = vmatprep.subr.mxu0 0.0
    %904 = vmatpush1.msra.mxu0 0.0
    %905 = vmatprep.subr.mxu0 0.0
    %906 = vmatpush1.msra.mxu0 0.0
    %907 = vmatprep.subr.mxu0 0.0
    %908 = vmatpush1.msra.mxu0 0.0
    %909 = vmatprep.subr.mxu0 0.0
    %910 = vmatpush1.msra.mxu0 0.0
    %911 = vmatprep.subr.mxu0 0.0
    %912 = vmatpush1.msra.mxu0 0.0
    %913 = vmatprep.subr.mxu0 0.0
    %914 = vmatpush1.msra.mxu0 0.0
    %915 = vmatprep.subr.mxu0 0.0
    %916 = vmatpush1.msra.mxu0 0.0
    %917 = vmatprep.subr.mxu0 0.0
    %918 = vmatpush1.msra.mxu0 0.0
    %919 = vmatprep.subr.mxu0 0.0
    %920 = vmatpush1.msra.mxu0 0.0
    %921 = vmatprep.mubr.f32.mxu0 0.0
    %922 = vmatmul.mubr.f32.gmra.mrb[0].mxu0 %v645
    %v923 = vpop.f32.mrb[0].mxu0
    %v924 = vadd.f32 0.0, %v923
    %v925 = vpop.f32.mrb[0].mxu0
    %926 = vdwg.mxu0
    %vm927 = vcmask 64512
    %v929 = vsel %vm927, %v714, 0
    %v932 = vsel %vm927, %v431, 0
    %934 = vmatprep.subr.mxu0 0.0
    %935 = vmatpush1.xpose.msra.mxu0 %v932
    %936 = vmatprep.subr.mxu0 0.0
    %937 = vmatpush1.xpose.msra.mxu0 0.0
    %938 = vmatprep.subr.mxu0 0.0
    %939 = vmatpush1.xpose.msra.mxu0 0.0
    %940 = vmatprep.subr.mxu0 0.0
    %941 = vmatpush1.xpose.msra.mxu0 0.0
    %942 = vmatprep.subr.mxu0 0.0
    %943 = vmatpush1.xpose.msra.mxu0 0.0
    %944 = vmatprep.subr.mxu0 0.0
    %945 = vmatpush1.xpose.msra.mxu0 0.0
    %946 = vmatprep.subr.mxu0 0.0
    %947 = vmatpush1.xpose.msra.mxu0 0.0
    %948 = vmatprep.subr.mxu0 0.0
    %949 = vmatpush1.xpose.msra.mxu0 0.0
    %950 = vmatprep.subr.mxu0 0.0
    %951 = vmatpush1.xpose.msra.mxu0 0.0
    %952 = vmatprep.subr.mxu0 0.0
    %953 = vmatpush1.xpose.msra.mxu0 0.0
    %954 = vmatprep.subr.mxu0 0.0
    %955 = vmatpush1.xpose.msra.mxu0 0.0
    %956 = vmatprep.subr.mxu0 0.0
    %957 = vmatpush1.xpose.msra.mxu0 0.0
    %958 = vmatprep.subr.mxu0 0.0
    %959 = vmatpush1.xpose.msra.mxu0 0.0
    %960 = vmatprep.subr.mxu0 0.0
    %961 = vmatpush1.xpose.msra.mxu0 0.0
    %962 = vmatprep.subr.mxu0 0.0
    %963 = vmatpush1.xpose.msra.mxu0 0.0
    %964 = vmatprep.subr.mxu0 0.0
    %965 = vmatpush1.xpose.msra.mxu0 0.0
    %966 = vmatprep.subr.mxu0 0.0
    %967 = vmatpush1.xpose.msra.mxu0 0.0
    %968 = vmatprep.subr.mxu0 0.0
    %969 = vmatpush1.xpose.msra.mxu0 0.0
    %970 = vmatprep.subr.mxu0 0.0
    %971 = vmatpush1.xpose.msra.mxu0 0.0
    %972 = vmatprep.subr.mxu0 0.0
    %973 = vmatpush1.xpose.msra.mxu0 0.0
    %974 = vmatprep.subr.mxu0 0.0
    %975 = vmatpush1.xpose.msra.mxu0 0.0
    %976 = vmatprep.subr.mxu0 0.0
    %977 = vmatpush1.xpose.msra.mxu0 0.0
    %978 = vmatprep.subr.mxu0 0.0
    %979 = vmatpush1.xpose.msra.mxu0 0.0
    %980 = vmatprep.subr.mxu0 0.0
    %981 = vmatpush1.xpose.msra.mxu0 0.0
    %982 = vmatprep.subr.mxu0 0.0
    %983 = vmatpush1.xpose.msra.mxu0 0.0
    %984 = vmatprep.subr.mxu0 0.0
    %985 = vmatpush1.xpose.msra.mxu0 0.0
    %986 = vmatprep.subr.mxu0 0.0
    %987 = vmatpush1.xpose.msra.mxu0 0.0
    %988 = vmatprep.subr.mxu0 0.0
    %989 = vmatpush1.xpose.msra.mxu0 0.0
    %990 = vmatprep.subr.mxu0 0.0
    %991 = vmatpush1.xpose.msra.mxu0 0.0
    %992 = vmatprep.subr.mxu0 0.0
    %993 = vmatpush1.xpose.msra.mxu0 0.0
    %994 = vmatprep.subr.mxu0 0.0
    %995 = vmatpush1.xpose.msra.mxu0 0.0
    %996 = vmatprep.subr.mxu0 0.0
    %997 = vmatpush1.xpose.msra.mxu0 0.0
    %998 = vmatprep.mubr.f32.mxu0 0.0
    %999 = vmatmul.mubr.f32.gmra.mrb[0].mxu0 %v929
    %v1000 = vpop.f32.mrb[0].mxu0
    %v1001 = vadd.f32 0.0, %v1000
    %v1002 = vpop.f32.mrb[0].mxu0
    %1003 = vdwg.mxu0
    %v1005 = vsel %vm927, %v784, 0
    %v1008 = vsel %vm927, %v501, 0
    %1010 = vmatprep.subr.mxu0 0.0
    %1011 = vmatpush1.xpose.msra.mxu0 %v1008
    %1012 = vmatprep.subr.mxu0 0.0
    %1013 = vmatpush1.xpose.msra.mxu0 0.0
    %1014 = vmatprep.subr.mxu0 0.0
    %1015 = vmatpush1.xpose.msra.mxu0 0.0
    %1016 = vmatprep.subr.mxu0 0.0
    %1017 = vmatpush1.xpose.msra.mxu0 0.0
    %1018 = vmatprep.subr.mxu0 0.0
    %1019 = vmatpush1.xpose.msra.mxu0 0.0
    %1020 = vmatprep.subr.mxu0 0.0
    %1021 = vmatpush1.xpose.msra.mxu0 0.0
    %1022 = vmatprep.subr.mxu0 0.0
    %1023 = vmatpush1.xpose.msra.mxu0 0.0
    %1024 = vmatprep.subr.mxu0 0.0
    %1025 = vmatpush1.xpose.msra.mxu0 0.0
    %1026 = vmatprep.subr.mxu0 0.0
    %1027 = vmatpush1.xpose.msra.mxu0 0.0
    %1028 = vmatprep.subr.mxu0 0.0
    %1029 = vmatpush1.xpose.msra.mxu0 0.0
    %1030 = vmatprep.subr.mxu0 0.0
    %1031 = vmatpush1.xpose.msra.mxu0 0.0
    %1032 = vmatprep.subr.mxu0 0.0
    %1033 = vmatpush1.xpose.msra.mxu0 0.0
    %1034 = vmatprep.subr.mxu0 0.0
    %1035 = vmatpush1.xpose.msra.mxu0 0.0
    %1036 = vmatprep.subr.mxu0 0.0
    %1037 = vmatpush1.xpose.msra.mxu0 0.0
    %1038 = vmatprep.subr.mxu0 0.0
    %1039 = vmatpush1.xpose.msra.mxu0 0.0
    %1040 = vmatprep.subr.mxu0 0.0
    %1041 = vmatpush1.xpose.msra.mxu0 0.0
    %1042 = vmatprep.subr.mxu0 0.0
    %1043 = vmatpush1.xpose.msra.mxu0 0.0
    %1044 = vmatprep.subr.mxu0 0.0
    %1045 = vmatpush1.xpose.msra.mxu0 0.0
    %1046 = vmatprep.subr.mxu0 0.0
    %1047 = vmatpush1.xpose.msra.mxu0 0.0
    %1048 = vmatprep.subr.mxu0 0.0
    %1049 = vmatpush1.xpose.msra.mxu0 0.0
    %1050 = vmatprep.subr.mxu0 0.0
    %1051 = vmatpush1.xpose.msra.mxu0 0.0
    %1052 = vmatprep.subr.mxu0 0.0
    %1053 = vmatpush1.xpose.msra.mxu0 0.0
    %1054 = vmatprep.subr.mxu0 0.0
    %1055 = vmatpush1.xpose.msra.mxu0 0.0
    %1056 = vmatprep.subr.mxu0 0.0
    %1057 = vmatpush1.xpose.msra.mxu0 0.0
    %1058 = vmatprep.subr.mxu0 0.0
    %1059 = vmatpush1.xpose.msra.mxu0 0.0
    %1060 = vmatprep.subr.mxu0 0.0
    %1061 = vmatpush1.xpose.msra.mxu0 0.0
    %1062 = vmatprep.subr.mxu0 0.0
    %1063 = vmatpush1.xpose.msra.mxu0 0.0
    %1064 = vmatprep.subr.mxu0 0.0
    %1065 = vmatpush1.xpose.msra.mxu0 0.0
    %1066 = vmatprep.subr.mxu0 0.0
    %1067 = vmatpush1.xpose.msra.mxu0 0.0
    %1068 = vmatprep.subr.mxu0 0.0
    %1069 = vmatpush1.xpose.msra.mxu0 0.0
    %1070 = vmatprep.subr.mxu0 0.0
    %1071 = vmatpush1.xpose.msra.mxu0 0.0
    %1072 = vmatprep.subr.mxu0 0.0
    %1073 = vmatpush1.xpose.msra.mxu0 0.0
    %1074 = vmatprep.mubr.f32.mxu0 0.0
    %1075 = vmatmul.mubr.f32.gmra.mrb[0].mxu0 %v1005
    %v1076 = vpop.f32.mrb[0].mxu0
    %v1077 = vadd.f32 0.0, %v1076
    %v1078 = vpop.f32.mrb[0].mxu0
    %1079 = vdwg.mxu0
    %v1081 = vsel %vm927, %v854, 0
    %v1084 = vsel %vm927, %v571, 0
    %1086 = vmatprep.subr.mxu0 0.0
    %1087 = vmatpush1.xpose.msra.mxu0 %v1084
    %1088 = vmatprep.subr.mxu0 0.0
    %1089 = vmatpush1.xpose.msra.mxu0 0.0
    %1090 = vmatprep.subr.mxu0 0.0
    %1091 = vmatpush1.xpose.msra.mxu0 0.0
    %1092 = vmatprep.subr.mxu0 0.0
    %1093 = vmatpush1.xpose.msra.mxu0 0.0
    %1094 = vmatprep.subr.mxu0 0.0
    %1095 = vmatpush1.xpose.msra.mxu0 0.0
    %1096 = vmatprep.subr.mxu0 0.0
    %1097 = vmatpush1.xpose.msra.mxu0 0.0
    %1098 = vmatprep.subr.mxu0 0.0
    %1099 = vmatpush1.xpose.msra.mxu0 0.0
    %1100 = vmatprep.subr.mxu0 0.0
    %1101 = vmatpush1.xpose.msra.mxu0 0.0
    %1102 = vmatprep.subr.mxu0 0.0
    %1103 = vmatpush1.xpose.msra.mxu0 0.0
    %1104 = vmatprep.subr.mxu0 0.0
    %1105 = vmatpush1.xpose.msra.mxu0 0.0
    %1106 = vmatprep.subr.mxu0 0.0
    %1107 = vmatpush1.xpose.msra.mxu0 0.0
    %1108 = vmatprep.subr.mxu0 0.0
    %1109 = vmatpush1.xpose.msra.mxu0 0.0
    %1110 = vmatprep.subr.mxu0 0.0
    %1111 = vmatpush1.xpose.msra.mxu0 0.0
    %1112 = vmatprep.subr.mxu0 0.0
    %1113 = vmatpush1.xpose.msra.mxu0 0.0
    %1114 = vmatprep.subr.mxu0 0.0
    %1115 = vmatpush1.xpose.msra.mxu0 0.0
    %1116 = vmatprep.subr.mxu0 0.0
    %1117 = vmatpush1.xpose.msra.mxu0 0.0
    %1118 = vmatprep.subr.mxu0 0.0
    %1119 = vmatpush1.xpose.msra.mxu0 0.0
    %1120 = vmatprep.subr.mxu0 0.0
    %1121 = vmatpush1.xpose.msra.mxu0 0.0
    %1122 = vmatprep.subr.mxu0 0.0
    %1123 = vmatpush1.xpose.msra.mxu0 0.0
    %1124 = vmatprep.subr.mxu0 0.0
    %1125 = vmatpush1.xpose.msra.mxu0 0.0
    %1126 = vmatprep.subr.mxu0 0.0
    %1127 = vmatpush1.xpose.msra.mxu0 0.0
    %1128 = vmatprep.subr.mxu0 0.0
    %1129 = vmatpush1.xpose.msra.mxu0 0.0
    %1130 = vmatprep.subr.mxu0 0.0
    %1131 = vmatpush1.xpose.msra.mxu0 0.0
    %1132 = vmatprep.subr.mxu0 0.0
    %1133 = vmatpush1.xpose.msra.mxu0 0.0
    %1134 = vmatprep.subr.mxu0 0.0
    %1135 = vmatpush1.xpose.msra.mxu0 0.0
    %1136 = vmatprep.subr.mxu0 0.0
    %1137 = vmatpush1.xpose.msra.mxu0 0.0
    %1138 = vmatprep.subr.mxu0 0.0
    %1139 = vmatpush1.xpose.msra.mxu0 0.0
    %1140 = vmatprep.subr.mxu0 0.0
    %1141 = vmatpush1.xpose.msra.mxu0 0.0
    %1142 = vmatprep.subr.mxu0 0.0
    %1143 = vmatpush1.xpose.msra.mxu0 0.0
    %1144 = vmatprep.subr.mxu0 0.0
    %1145 = vmatpush1.xpose.msra.mxu0 0.0
    %1146 = vmatprep.subr.mxu0 0.0
    %1147 = vmatpush1.xpose.msra.mxu0 0.0
    %1148 = vmatprep.subr.mxu0 0.0
    %1149 = vmatpush1.xpose.msra.mxu0 0.0
    %1150 = vmatprep.mubr.f32.mxu0 0.0
    %1151 = vmatmul.mubr.f32.gmra.mrb[0].mxu0 %v1081
    %v1152 = vpop.f32.mrb[0].mxu0
    %v1153 = vadd.f32 0.0, %v1152
    %v1154 = vpop.f32.mrb[0].mxu0
    %1155 = vdwg.mxu0
    %v1157 = vsel %vm927, %v924, 0
    %v1160 = vsel %vm927, %v641, 0
    %1162 = vmatprep.subr.mxu0 0.0
    %1163 = vmatpush1.xpose.msra.mxu0 %v1160
    %1164 = vmatprep.subr.mxu0 0.0
    %1165 = vmatpush1.xpose.msra.mxu0 0.0
    %1166 = vmatprep.subr.mxu0 0.0
    %1167 = vmatpush1.xpose.msra.mxu0 0.0
    %1168 = vmatprep.subr.mxu0 0.0
    %1169 = vmatpush1.xpose.msra.mxu0 0.0
    %1170 = vmatprep.subr.mxu0 0.0
    %1171 = vmatpush1.xpose.msra.mxu0 0.0
    %1172 = vmatprep.subr.mxu0 0.0
    %1173 = vmatpush1.xpose.msra.mxu0 0.0
    %1174 = vmatprep.subr.mxu0 0.0
    %1175 = vmatpush1.xpose.msra.mxu0 0.0
    %1176 = vmatprep.subr.mxu0 0.0
    %1177 = vmatpush1.xpose.msra.mxu0 0.0
    %1178 = vmatprep.subr.mxu0 0.0
    %1179 = vmatpush1.xpose.msra.mxu0 0.0
    %1180 = vmatprep.subr.mxu0 0.0
    %1181 = vmatpush1.xpose.msra.mxu0 0.0
    %1182 = vmatprep.subr.mxu0 0.0
    %1183 = vmatpush1.xpose.msra.mxu0 0.0
    %1184 = vmatprep.subr.mxu0 0.0
    %1185 = vmatpush1.xpose.msra.mxu0 0.0
    %1186 = vmatprep.subr.mxu0 0.0
    %1187 = vmatpush1.xpose.msra.mxu0 0.0
    %1188 = vmatprep.subr.mxu0 0.0
    %1189 = vmatpush1.xpose.msra.mxu0 0.0
    %1190 = vmatprep.subr.mxu0 0.0
    %1191 = vmatpush1.xpose.msra.mxu0 0.0
    %1192 = vmatprep.subr.mxu0 0.0
    %1193 = vmatpush1.xpose.msra.mxu0 0.0
    %1194 = vmatprep.subr.mxu0 0.0
    %1195 = vmatpush1.xpose.msra.mxu0 0.0
    %1196 = vmatprep.subr.mxu0 0.0
    %1197 = vmatpush1.xpose.msra.mxu0 0.0
    %1198 = vmatprep.subr.mxu0 0.0
    %1199 = vmatpush1.xpose.msra.mxu0 0.0
    %1200 = vmatprep.subr.mxu0 0.0
    %1201 = vmatpush1.xpose.msra.mxu0 0.0
    %1202 = vmatprep.subr.mxu0 0.0
    %1203 = vmatpush1.xpose.msra.mxu0 0.0
    %1204 = vmatprep.subr.mxu0 0.0
    %1205 = vmatpush1.xpose.msra.mxu0 0.0
    %1206 = vmatprep.subr.mxu0 0.0
    %1207 = vmatpush1.xpose.msra.mxu0 0.0
    %1208 = vmatprep.subr.mxu0 0.0
    %1209 = vmatpush1.xpose.msra.mxu0 0.0
    %1210 = vmatprep.subr.mxu0 0.0
    %1211 = vmatpush1.xpose.msra.mxu0 0.0
    %1212 = vmatprep.subr.mxu0 0.0
    %1213 = vmatpush1.xpose.msra.mxu0 0.0
    %1214 = vmatprep.subr.mxu0 0.0
    %1215 = vmatpush1.xpose.msra.mxu0 0.0
    %1216 = vmatprep.subr.mxu0 0.0
    %1217 = vmatpush1.xpose.msra.mxu0 0.0
    %1218 = vmatprep.subr.mxu0 0.0
    %1219 = vmatpush1.xpose.msra.mxu0 0.0
    %1220 = vmatprep.subr.mxu0 0.0
    %1221 = vmatpush1.xpose.msra.mxu0 0.0
    %1222 = vmatprep.subr.mxu0 0.0
    %1223 = vmatpush1.xpose.msra.mxu0 0.0
    %1224 = vmatprep.subr.mxu0 0.0
    %1225 = vmatpush1.xpose.msra.mxu0 0.0
    %1226 = vmatprep.mubr.f32.mxu0 0.0
    %1227 = vmatmul.mubr.f32.gmra.mrb[0].mxu0 %v1157
    %v1228 = vpop.f32.mrb[0].mxu0
    %v1229 = vadd.f32 0.0, %v1228
    %v1230 = vpop.f32.mrb[0].mxu0
    %1231 = vdwg.mxu0
    %v1232 = vsel %vm927, %v1001, -inf
    %1233 = vmax.xlane.f32.xlu0 %v1232
    %v1234 = vpop.xlane.xlu0 %1233
    %v1235 = vsel %vm927, %v1077, -inf
    %1236 = vmax.xlane.f32.xlu0 %v1235
    %v1237 = vpop.xlane.xlu0 %1236
    %v1238 = vsel %vm927, %v1153, -inf
    %1239 = vmax.xlane.f32.xlu0 %v1238
    %v1240 = vpop.xlane.xlu0 %1239
    %v1241 = vsel %vm927, %v1229, -inf
    %1242 = vmax.xlane.f32.xlu0 %v1241
    %v1243 = vpop.xlane.xlu0 %1242
    %v1244 = vsub.f32 %v1001, %v1234
    %v1245 = vsub.f32 %v1077, %v1237
    %v1246 = vsub.f32 %v1153, %v1240
    %v1247 = vsub.f32 %v1229, %v1243
    %v1248 = vmul.f32 %v1244, 1.442695
    %v1249 = vpow.pop %v1248
    %v1250 = vmul.f32 %v1245, 1.442695
    %v1251 = vpow.pop %v1250
    %v1252 = vmul.f32 %v1246, 1.442695
    %v1253 = vpow.pop %v1252
    %v1254 = vmul.f32 %v1247, 1.442695
    %v1255 = vpow.pop %v1254
    %v1256 = vsel %vm927, %v1249, 0.0
    %1257 = vadd.xlane.f32.xlu0 %v1256
    %v1258 = vpop.xlane.xlu0 %1257
    %v1259 = vsel %vm927, %v1251, 0.0
    %1260 = vadd.xlane.f32.xlu0 %v1259
    %v1261 = vpop.xlane.xlu0 %1260
    %v1262 = vsel %vm927, %v1253, 0.0
    %1263 = vadd.xlane.f32.xlu0 %v1262
    %v1264 = vpop.xlane.xlu0 %1263
    %v1265 = vsel %vm927, %v1255, 0.0
    %1266 = vadd.xlane.f32.xlu0 %v1265
    %v1267 = vpop.xlane.xlu0 %1266
    %v1268 = vrcp.pop %v1258
    %v1269 = vrcp.pop %v1261
    %v1270 = vrcp.pop %v1264
    %v1271 = vrcp.pop %v1267
    %v1272 = vmul.f32 %v1249, %v1268
    %v1273 = vmul.f32 %v1251, %v1269
    %v1274 = vmul.f32 %v1253, %v1270
    %v1275 = vmul.f32 %v1255, %v1271
    %v1277 = vsel %vm927, %v1272, 0
    %1279 = vmatprep.subr.mxu0 0.0
    %1280 = vmatpush1.msra.mxu0 %v148
    %1281 = vmatprep.subr.mxu0 0.0
    %1282 = vmatpush1.msra.mxu0 0.0
    %1283 = vmatprep.subr.mxu0 0.0
    %1284 = vmatpush1.msra.mxu0 0.0
    %1285 = vmatprep.subr.mxu0 0.0
    %1286 = vmatpush1.msra.mxu0 0.0
    %1287 = vmatprep.subr.mxu0 0.0
    %1288 = vmatpush1.msra.mxu0 0.0
    %1289 = vmatprep.subr.mxu0 0.0
    %1290 = vmatpush1.msra.mxu0 0.0
    %1291 = vmatprep.subr.mxu0 0.0
    %1292 = vmatpush1.msra.mxu0 0.0
    %1293 = vmatprep.subr.mxu0 0.0
    %1294 = vmatpush1.msra.mxu0 0.0
    %1295 = vmatprep.subr.mxu0 0.0
    %1296 = vmatpush1.msra.mxu0 0.0
    %1297 = vmatprep.subr.mxu0 0.0
    %1298 = vmatpush1.msra.mxu0 0.0
    %1299 = vmatprep.subr.mxu0 0.0
    %1300 = vmatpush1.msra.mxu0 0.0
    %1301 = vmatprep.subr.mxu0 0.0
    %1302 = vmatpush1.msra.mxu0 0.0
    %1303 = vmatprep.subr.mxu0 0.0
    %1304 = vmatpush1.msra.mxu0 0.0
    %1305 = vmatprep.subr.mxu0 0.0
    %1306 = vmatpush1.msra.mxu0 0.0
    %1307 = vmatprep.subr.mxu0 0.0
    %1308 = vmatpush1.msra.mxu0 0.0
    %1309 = vmatprep.subr.mxu0 0.0
    %1310 = vmatpush1.msra.mxu0 0.0
    %1311 = vmatprep.subr.mxu0 0.0
    %1312 = vmatpush1.msra.mxu0 0.0
    %1313 = vmatprep.subr.mxu0 0.0
    %1314 = vmatpush1.msra.mxu0 0.0
    %1315 = vmatprep.subr.mxu0 0.0
    %1316 = vmatpush1.msra.mxu0 0.0
    %1317 = vmatprep.subr.mxu0 0.0
    %1318 = vmatpush1.msra.mxu0 0.0
    %1319 = vmatprep.subr.mxu0 0.0
    %1320 = vmatpush1.msra.mxu0 0.0
    %1321 = vmatprep.subr.mxu0 0.0
    %1322 = vmatpush1.msra.mxu0 0.0
    %1323 = vmatprep.subr.mxu0 0.0
    %1324 = vmatpush1.msra.mxu0 0.0
    %1325 = vmatprep.subr.mxu0 0.0
    %1326 = vmatpush1.msra.mxu0 0.0
    %1327 = vmatprep.subr.mxu0 0.0
    %1328 = vmatpush1.msra.mxu0 0.0
    %1329 = vmatprep.subr.mxu0 0.0
    %1330 = vmatpush1.msra.mxu0 0.0
    %1331 = vmatprep.subr.mxu0 0.0
    %1332 = vmatpush1.msra.mxu0 0.0
    %1333 = vmatprep.subr.mxu0 0.0
    %1334 = vmatpush1.msra.mxu0 0.0
    %1335 = vmatprep.subr.mxu0 0.0
    %1336 = vmatpush1.msra.mxu0 0.0
    %1337 = vmatprep.subr.mxu0 0.0
    %1338 = vmatpush1.msra.mxu0 0.0
    %1339 = vmatprep.subr.mxu0 0.0
    %1340 = vmatpush1.msra.mxu0 0.0
    %1341 = vmatprep.subr.mxu0 0.0
    %1342 = vmatpush1.msra.mxu0 0.0
    %1343 = vmatprep.mubr.f32.mxu0 0.0
    %1344 = vmatmul.mubr.f32.gmra.mrb[0].mxu0 %v1277
    %v1345 = vpop.f32.mrb[0].mxu0
    %v1346 = vadd.f32 0.0, %v1345
    %v1347 = vpop.f32.mrb[0].mxu0
    %1348 = vdwg.mxu0
    %v1350 = vsel %vm927, %v1273, 0
    %1352 = vmatprep.subr.mxu0 0.0
    %1353 = vmatpush1.msra.mxu0 %v218
    %1354 = vmatprep.subr.mxu0 0.0
    %1355 = vmatpush1.msra.mxu0 0.0
    %1356 = vmatprep.subr.mxu0 0.0
    %1357 = vmatpush1.msra.mxu0 0.0
    %1358 = vmatprep.subr.mxu0 0.0
    %1359 = vmatpush1.msra.mxu0 0.0
    %1360 = vmatprep.subr.mxu0 0.0
    %1361 = vmatpush1.msra.mxu0 0.0
    %1362 = vmatprep.subr.mxu0 0.0
    %1363 = vmatpush1.msra.mxu0 0.0
    %1364 = vmatprep.subr.mxu0 0.0
    %1365 = vmatpush1.msra.mxu0 0.0
    %1366 = vmatprep.subr.mxu0 0.0
    %1367 = vmatpush1.msra.mxu0 0.0
    %1368 = vmatprep.subr.mxu0 0.0
    %1369 = vmatpush1.msra.mxu0 0.0
    %1370 = vmatprep.subr.mxu0 0.0
    %1371 = vmatpush1.msra.mxu0 0.0
    %1372 = vmatprep.subr.mxu0 0.0
    %1373 = vmatpush1.msra.mxu0 0.0
    %1374 = vmatprep.subr.mxu0 0.0
    %1375 = vmatpush1.msra.mxu0 0.0
    %1376 = vmatprep.subr.mxu0 0.0
    %1377 = vmatpush1.msra.mxu0 0.0
    %1378 = vmatprep.subr.mxu0 0.0
    %1379 = vmatpush1.msra.mxu0 0.0
    %1380 = vmatprep.subr.mxu0 0.0
    %1381 = vmatpush1.msra.mxu0 0.0
    %1382 = vmatprep.subr.mxu0 0.0
    %1383 = vmatpush1.msra.mxu0 0.0
    %1384 = vmatprep.subr.mxu0 0.0
    %1385 = vmatpush1.msra.mxu0 0.0
    %1386 = vmatprep.subr.mxu0 0.0
    %1387 = vmatpush1.msra.mxu0 0.0
    %1388 = vmatprep.subr.mxu0 0.0
    %1389 = vmatpush1.msra.mxu0 0.0
    %1390 = vmatprep.subr.mxu0 0.0
    %1391 = vmatpush1.msra.mxu0 0.0
    %1392 = vmatprep.subr.mxu0 0.0
    %1393 = vmatpush1.msra.mxu0 0.0
    %1394 = vmatprep.subr.mxu0 0.0
    %1395 = vmatpush1.msra.mxu0 0.0
    %1396 = vmatprep.subr.mxu0 0.0
    %1397 = vmatpush1.msra.mxu0 0.0
    %1398 = vmatprep.subr.mxu0 0.0
    %1399 = vmatpush1.msra.mxu0 0.0
    %1400 = vmatprep.subr.mxu0 0.0
    %1401 = vmatpush1.msra.mxu0 0.0
    %1402 = vmatprep.subr.mxu0 0.0
    %1403 = vmatpush1.msra.mxu0 0.0
    %1404 = vmatprep.subr.mxu0 0.0
    %1405 = vmatpush1.msra.mxu0 0.0
    %1406 = vmatprep.subr.mxu0 0.0
    %1407 = vmatpush1.msra.mxu0 0.0
    %1408 = vmatprep.subr.mxu0 0.0
    %1409 = vmatpush1.msra.mxu0 0.0
    %1410 = vmatprep.subr.mxu0 0.0
    %1411 = vmatpush1.msra.mxu0 0.0
    %1412 = vmatprep.subr.mxu0 0.0
    %1413 = vmatpush1.msra.mxu0 0.0
    %1414 = vmatprep.subr.mxu0 0.0
    %1415 = vmatpush1.msra.mxu0 0.0
    %1416 = vmatprep.mubr.f32.mxu0 0.0
    %1417 = vmatmul.mubr.f32.gmra.mrb[0].mxu0 %v1350
    %v1418 = vpop.f32.mrb[0].mxu0
    %v1419 = vadd.f32 0.0, %v1418
    %v1420 = vpop.f32.mrb[0].mxu0
    %1421 = vdwg.mxu0
    %v1423 = vsel %vm927, %v1274, 0
    %1425 = vmatprep.subr.mxu0 0.0
    %1426 = vmatpush1.msra.mxu0 %v288
    %1427 = vmatprep.subr.mxu0 0.0
    %1428 = vmatpush1.msra.mxu0 0.0
    %1429 = vmatprep.subr.mxu0 0.0
    %1430 = vmatpush1.msra.mxu0 0.0
    %1431 = vmatprep.subr.mxu0 0.0
    %1432 = vmatpush1.msra.mxu0 0.0
    %1433 = vmatprep.subr.mxu0 0.0
    %1434 = vmatpush1.msra.mxu0 0.0
    %1435 = vmatprep.subr.mxu0 0.0
    %1436 = vmatpush1.msra.mxu0 0.0
    %1437 = vmatprep.subr.mxu0 0.0
    %1438 = vmatpush1.msra.mxu0 0.0
    %1439 = vmatprep.subr.mxu0 0.0
    %1440 = vmatpush1.msra.mxu0 0.0
    %1441 = vmatprep.subr.mxu0 0.0
    %1442 = vmatpush1.msra.mxu0 0.0
    %1443 = vmatprep.subr.mxu0 0.0
    %1444 = vmatpush1.msra.mxu0 0.0
    %1445 = vmatprep.subr.mxu0 0.0
    %1446 = vmatpush1.msra.mxu0 0.0
    %1447 = vmatprep.subr.mxu0 0.0
    %1448 = vmatpush1.msra.mxu0 0.0
    %1449 = vmatprep.subr.mxu0 0.0
    %1450 = vmatpush1.msra.mxu0 0.0
    %1451 = vmatprep.subr.mxu0 0.0
    %1452 = vmatpush1.msra.mxu0 0.0
    %1453 = vmatprep.subr.mxu0 0.0
    %1454 = vmatpush1.msra.mxu0 0.0
    %1455 = vmatprep.subr.mxu0 0.0
    %1456 = vmatpush1.msra.mxu0 0.0
    %1457 = vmatprep.subr.mxu0 0.0
    %1458 = vmatpush1.msra.mxu0 0.0
    %1459 = vmatprep.subr.mxu0 0.0
    %1460 = vmatpush1.msra.mxu0 0.0
    %1461 = vmatprep.subr.mxu0 0.0
    %1462 = vmatpush1.msra.mxu0 0.0
    %1463 = vmatprep.subr.mxu0 0.0
    %1464 = vmatpush1.msra.mxu0 0.0
    %1465 = vmatprep.subr.mxu0 0.0
    %1466 = vmatpush1.msra.mxu0 0.0
    %1467 = vmatprep.subr.mxu0 0.0
    %1468 = vmatpush1.msra.mxu0 0.0
    %1469 = vmatprep.subr.mxu0 0.0
    %1470 = vmatpush1.msra.mxu0 0.0
    %1471 = vmatprep.subr.mxu0 0.0
    %1472 = vmatpush1.msra.mxu0 0.0
    %1473 = vmatprep.subr.mxu0 0.0
    %1474 = vmatpush1.msra.mxu0 0.0
    %1475 = vmatprep.subr.mxu0 0.0
    %1476 = vmatpush1.msra.mxu0 0.0
    %1477 = vmatprep.subr.mxu0 0.0
    %1478 = vmatpush1.msra.mxu0 0.0
    %1479 = vmatprep.subr.mxu0 0.0
    %1480 = vmatpush1.msra.mxu0 0.0
    %1481 = vmatprep.subr.mxu0 0.0
    %1482 = vmatpush1.msra.mxu0 0.0
    %1483 = vmatprep.subr.mxu0 0.0
    %1484 = vmatpush1.msra.mxu0 0.0
    %1485 = vmatprep.subr.mxu0 0.0
    %1486 = vmatpush1.msra.mxu0 0.0
    %1487 = vmatprep.subr.mxu0 0.0
    %1488 = vmatpush1.msra.mxu0 0.0
    %1489 = vmatprep.mubr.f32.mxu0 0.0
    %1490 = vmatmul.mubr.f32.gmra.mrb[0].mxu0 %v1423
    %v1491 = vpop.f32.mrb[0].mxu0
    %v1492 = vadd.f32 0.0, %v1491
    %v1493 = vpop.f32.mrb[0].mxu0
    %1494 = vdwg.mxu0
    %v1496 = vsel %vm927, %v1275, 0
    %1498 = vmatprep.subr.mxu0 0.0
    %1499 = vmatpush1.msra.mxu0 %v358
    %1500 = vmatprep.subr.mxu0 0.0
    %1501 = vmatpush1.msra.mxu0 0.0
    %1502 = vmatprep.subr.mxu0 0.0
    %1503 = vmatpush1.msra.mxu0 0.0
    %1504 = vmatprep.subr.mxu0 0.0
    %1505 = vmatpush1.msra.mxu0 0.0
    %1506 = vmatprep.subr.mxu0 0.0
    %1507 = vmatpush1.msra.mxu0 0.0
    %1508 = vmatprep.subr.mxu0 0.0
    %1509 = vmatpush1.msra.mxu0 0.0
    %1510 = vmatprep.subr.mxu0 0.0
    %1511 = vmatpush1.msra.mxu0 0.0
    %1512 = vmatprep.subr.mxu0 0.0
    %1513 = vmatpush1.msra.mxu0 0.0
    %1514 = vmatprep.subr.mxu0 0.0
    %1515 = vmatpush1.msra.mxu0 0.0
    %1516 = vmatprep.subr.mxu0 0.0
    %1517 = vmatpush1.msra.mxu0 0.0
    %1518 = vmatprep.subr.mxu0 0.0
    %1519 = vmatpush1.msra.mxu0 0.0
    %1520 = vmatprep.subr.mxu0 0.0
    %1521 = vmatpush1.msra.mxu0 0.0
    %1522 = vmatprep.subr.mxu0 0.0
    %1523 = vmatpush1.msra.mxu0 0.0
    %1524 = vmatprep.subr.mxu0 0.0
    %1525 = vmatpush1.msra.mxu0 0.0
    %1526 = vmatprep.subr.mxu0 0.0
    %1527 = vmatpush1.msra.mxu0 0.0
    %1528 = vmatprep.subr.mxu0 0.0
    %1529 = vmatpush1.msra.mxu0 0.0
    %1530 = vmatprep.subr.mxu0 0.0
    %1531 = vmatpush1.msra.mxu0 0.0
    %1532 = vmatprep.subr.mxu0 0.0
    %1533 = vmatpush1.msra.mxu0 0.0
    %1534 = vmatprep.subr.mxu0 0.0
    %1535 = vmatpush1.msra.mxu0 0.0
    %1536 = vmatprep.subr.mxu0 0.0
    %1537 = vmatpush1.msra.mxu0 0.0
    %1538 = vmatprep.subr.mxu0 0.0
    %1539 = vmatpush1.msra.mxu0 0.0
    %1540 = vmatprep.subr.mxu0 0.0
    %1541 = vmatpush1.msra.mxu0 0.0
    %1542 = vmatprep.subr.mxu0 0.0
    %1543 = vmatpush1.msra.mxu0 0.0
    %1544 = vmatprep.subr.mxu0 0.0
    %1545 = vmatpush1.msra.mxu0 0.0
    %1546 = vmatprep.subr.mxu0 0.0
    %1547 = vmatpush1.msra.mxu0 0.0
    %1548 = vmatprep.subr.mxu0 0.0
    %1549 = vmatpush1.msra.mxu0 0.0
    %1550 = vmatprep.subr.mxu0 0.0
    %1551 = vmatpush1.msra.mxu0 0.0
    %1552 = vmatprep.subr.mxu0 0.0
    %1553 = vmatpush1.msra.mxu0 0.0
    %1554 = vmatprep.subr.mxu0 0.0
    %1555 = vmatpush1.msra.mxu0 0.0
    %1556 = vmatprep.subr.mxu0 0.0
    %1557 = vmatpush1.msra.mxu0 0.0
    %1558 = vmatprep.subr.mxu0 0.0
    %1559 = vmatpush1.msra.mxu0 0.0
    %1560 = vmatprep.subr.mxu0 0.0
    %1561 = vmatpush1.msra.mxu0 0.0
    %1562 = vmatprep.mubr.f32.mxu0 0.0
    %1563 = vmatmul.mubr.f32.gmra.mrb[0].mxu0 %v1496
    %v1564 = vpop.f32.mrb[0].mxu0
    %v1565 = vadd.f32 0.0, %v1564
    %v1566 = vpop.f32.mrb[0].mxu0
    %1567 = vdwg.mxu0
    %v1568 = vld [vmem:[%s4] sm:$0xff]
    %v1569 = vld [vmem:[%s4 + $0x8] sm:$0xff]
    %v1570 = vld [vmem:[%s4 + $0x10] sm:$0xff]
    %v1571 = vld [vmem:[%s4 + $0x18] sm:$0xff]
    %v1573 = vsel %vm927, %v1346, 0
    %1575 = vmatprep.subr.mxu0 0.0
    %1576 = vmatpush1.msra.mxu0 %v1568
    %1577 = vmatprep.subr.mxu0 0.0
    %1578 = vmatpush1.msra.mxu0 0.0
    %1579 = vmatprep.subr.mxu0 0.0
    %1580 = vmatpush1.msra.mxu0 0.0
    %1581 = vmatprep.subr.mxu0 0.0
    %1582 = vmatpush1.msra.mxu0 0.0
    %1583 = vmatprep.subr.mxu0 0.0
    %1584 = vmatpush1.msra.mxu0 0.0
    %1585 = vmatprep.subr.mxu0 0.0
    %1586 = vmatpush1.msra.mxu0 0.0
    %1587 = vmatprep.subr.mxu0 0.0
    %1588 = vmatpush1.msra.mxu0 0.0
    %1589 = vmatprep.subr.mxu0 0.0
    %1590 = vmatpush1.msra.mxu0 0.0
    %1591 = vmatprep.subr.mxu0 0.0
    %1592 = vmatpush1.msra.mxu0 0.0
    %1593 = vmatprep.subr.mxu0 0.0
    %1594 = vmatpush1.msra.mxu0 0.0
    %1595 = vmatprep.subr.mxu0 0.0
    %1596 = vmatpush1.msra.mxu0 0.0
    %1597 = vmatprep.subr.mxu0 0.0
    %1598 = vmatpush1.msra.mxu0 0.0
    %1599 = vmatprep.subr.mxu0 0.0
    %1600 = vmatpush1.msra.mxu0 0.0
    %1601 = vmatprep.subr.mxu0 0.0
    %1602 = vmatpush1.msra.mxu0 0.0
    %1603 = vmatprep.subr.mxu0 0.0
    %1604 = vmatpush1.msra.mxu0 0.0
    %1605 = vmatprep.subr.mxu0 0.0
    %1606 = vmatpush1.msra.mxu0 0.0
    %1607 = vmatprep.subr.mxu0 0.0
    %1608 = vmatpush1.msra.mxu0 0.0
    %1609 = vmatprep.subr.mxu0 0.0
    %1610 = vmatpush1.msra.mxu0 0.0
    %1611 = vmatprep.subr.mxu0 0.0
    %1612 = vmatpush1.msra.mxu0 0.0
    %1613 = vmatprep.subr.mxu0 0.0
    %1614 = vmatpush1.msra.mxu0 0.0
    %1615 = vmatprep.subr.mxu0 0.0
    %1616 = vmatpush1.msra.mxu0 0.0
    %1617 = vmatprep.subr.mxu0 0.0
    %1618 = vmatpush1.msra.mxu0 0.0
    %1619 = vmatprep.subr.mxu0 0.0
    %1620 = vmatpush1.msra.mxu0 0.0
    %1621 = vmatprep.subr.mxu0 0.0
    %1622 = vmatpush1.msra.mxu0 0.0
    %1623 = vmatprep.subr.mxu0 0.0
    %1624 = vmatpush1.msra.mxu0 0.0
    %1625 = vmatprep.subr.mxu0 0.0
    %1626 = vmatpush1.msra.mxu0 0.0
    %1627 = vmatprep.subr.mxu0 0.0
    %1628 = vmatpush1.msra.mxu0 0.0
    %1629 = vmatprep.subr.mxu0 0.0
    %1630 = vmatpush1.msra.mxu0 0.0
    %1631 = vmatprep.subr.mxu0 0.0
    %1632 = vmatpush1.msra.mxu0 0.0
    %1633 = vmatprep.subr.mxu0 0.0
    %1634 = vmatpush1.msra.mxu0 0.0
    %1635 = vmatprep.subr.mxu0 0.0
    %1636 = vmatpush1.msra.mxu0 0.0
    %1637 = vmatprep.subr.mxu0 0.0
    %1638 = vmatpush1.msra.mxu0 0.0
    %1639 = vmatprep.mubr.f32.mxu0 0.0
    %1640 = vmatmul.mubr.f32.gmra.mrb[0].mxu0 %v1573
    %v1641 = vpop.f32.mrb[0].mxu0
    %v1642 = vadd.f32 0.0, %v1641
    %v1643 = vpop.f32.mrb[0].mxu0
    %1644 = vdwg.mxu0
    %v1646 = vsel %vm927, %v1419, 0
    %1648 = vmatprep.subr.mxu0 0.0
    %1649 = vmatpush1.msra.mxu0 %v1569
    %1650 = vmatprep.subr.mxu0 0.0
    %1651 = vmatpush1.msra.mxu0 0.0
    %1652 = vmatprep.subr.mxu0 0.0
    %1653 = vmatpush1.msra.mxu0 0.0
    %1654 = vmatprep.subr.mxu0 0.0
    %1655 = vmatpush1.msra.mxu0 0.0
    %1656 = vmatprep.subr.mxu0 0.0
    %1657 = vmatpush1.msra.mxu0 0.0
    %1658 = vmatprep.subr.mxu0 0.0
    %1659 = vmatpush1.msra.mxu0 0.0
    %1660 = vmatprep.subr.mxu0 0.0
    %1661 = vmatpush1.msra.mxu0 0.0
    %1662 = vmatprep.subr.mxu0 0.0
    %1663 = vmatpush1.msra.mxu0 0.0
    %1664 = vmatprep.subr.mxu0 0.0
    %1665 = vmatpush1.msra.mxu0 0.0
    %1666 = vmatprep.subr.mxu0 0.0
    %1667 = vmatpush1.msra.mxu0 0.0
    %1668 = vmatprep.subr.mxu0 0.0
    %1669 = vmatpush1.msra.mxu0 0.0
    %1670 = vmatprep.subr.mxu0 0.0
    %1671 = vmatpush1.msra.mxu0 0.0
    %1672 = vmatprep.subr.mxu0 0.0
    %1673 = vmatpush1.msra.mxu0 0.0
    %1674 = vmatprep.subr.mxu0 0.0
    %1675 = vmatpush1.msra.mxu0 0.0
    %1676 = vmatprep.subr.mxu0 0.0
    %1677 = vmatpush1.msra.mxu0 0.0
    %1678 = vmatprep.subr.mxu0 0.0
    %1679 = vmatpush1.msra.mxu0 0.0
    %1680 = vmatprep.subr.mxu0 0.0
    %1681 = vmatpush1.msra.mxu0 0.0
    %1682 = vmatprep.subr.mxu0 0.0
    %1683 = vmatpush1.msra.mxu0 0.0
    %1684 = vmatprep.subr.mxu0 0.0
    %1685 = vmatpush1.msra.mxu0 0.0
    %1686 = vmatprep.subr.mxu0 0.0
    %1687 = vmatpush1.msra.mxu0 0.0
    %1688 = vmatprep.subr.mxu0 0.0
    %1689 = vmatpush1.msra.mxu0 0.0
    %1690 = vmatprep.subr.mxu0 0.0
    %1691 = vmatpush1.msra.mxu0 0.0
    %1692 = vmatprep.subr.mxu0 0.0
    %1693 = vmatpush1.msra.mxu0 0.0
    %1694 = vmatprep.subr.mxu0 0.0
    %1695 = vmatpush1.msra.mxu0 0.0
    %1696 = vmatprep.subr.mxu0 0.0
    %1697 = vmatpush1.msra.mxu0 0.0
    %1698 = vmatprep.subr.mxu0 0.0
    %1699 = vmatpush1.msra.mxu0 0.0
    %1700 = vmatprep.subr.mxu0 0.0
    %1701 = vmatpush1.msra.mxu0 0.0
    %1702 = vmatprep.subr.mxu0 0.0
    %1703 = vmatpush1.msra.mxu0 0.0
    %1704 = vmatprep.subr.mxu0 0.0
    %1705 = vmatpush1.msra.mxu0 0.0
    %1706 = vmatprep.subr.mxu0 0.0
    %1707 = vmatpush1.msra.mxu0 0.0
    %1708 = vmatprep.subr.mxu0 0.0
    %1709 = vmatpush1.msra.mxu0 0.0
    %1710 = vmatprep.subr.mxu0 0.0
    %1711 = vmatpush1.msra.mxu0 0.0
    %1712 = vmatprep.mubr.f32.mxu0 0.0
    %1713 = vmatmul.mubr.f32.gmra.mrb[0].mxu0 %v1646
    %v1714 = vpop.f32.mrb[0].mxu0
    %v1715 = vadd.f32 0.0, %v1714
    %v1716 = vpop.f32.mrb[0].mxu0
    %1717 = vdwg.mxu0
    %v1719 = vsel %vm927, %v1492, 0
    %1721 = vmatprep.subr.mxu0 0.0
    %1722 = vmatpush1.msra.mxu0 %v1570
    %1723 = vmatprep.subr.mxu0 0.0
    %1724 = vmatpush1.msra.mxu0 0.0
    %1725 = vmatprep.subr.mxu0 0.0
    %1726 = vmatpush1.msra.mxu0 0.0
    %1727 = vmatprep.subr.mxu0 0.0
    %1728 = vmatpush1.msra.mxu0 0.0
    %1729 = vmatprep.subr.mxu0 0.0
    %1730 = vmatpush1.msra.mxu0 0.0
    %1731 = vmatprep.subr.mxu0 0.0
    %1732 = vmatpush1.msra.mxu0 0.0
    %1733 = vmatprep.subr.mxu0 0.0
    %1734 = vmatpush1.msra.mxu0 0.0
    %1735 = vmatprep.subr.mxu0 0.0
    %1736 = vmatpush1.msra.mxu0 0.0
    %1737 = vmatprep.subr.mxu0 0.0
    %1738 = vmatpush1.msra.mxu0 0.0
    %1739 = vmatprep.subr.mxu0 0.0
    %1740 = vmatpush1.msra.mxu0 0.0
    %1741 = vmatprep.subr.mxu0 0.0
    %1742 = vmatpush1.msra.mxu0 0.0
    %1743 = vmatprep.subr.mxu0 0.0
    %1744 = vmatpush1.msra.mxu0 0.0
    %1745 = vmatprep.subr.mxu0 0.0
    %1746 = vmatpush1.msra.mxu0 0.0
    %1747 = vmatprep.subr.mxu0 0.0
    %1748 = vmatpush1.msra.mxu0 0.0
    %1749 = vmatprep.subr.mxu0 0.0
    %1750 = vmatpush1.msra.mxu0 0.0
    %1751 = vmatprep.subr.mxu0 0.0
    %1752 = vmatpush1.msra.mxu0 0.0
    %1753 = vmatprep.subr.mxu0 0.0
    %1754 = vmatpush1.msra.mxu0 0.0
    %1755 = vmatprep.subr.mxu0 0.0
    %1756 = vmatpush1.msra.mxu0 0.0
    %1757 = vmatprep.subr.mxu0 0.0
    %1758 = vmatpush1.msra.mxu0 0.0
    %1759 = vmatprep.subr.mxu0 0.0
    %1760 = vmatpush1.msra.mxu0 0.0
    %1761 = vmatprep.subr.mxu0 0.0
    %1762 = vmatpush1.msra.mxu0 0.0
    %1763 = vmatprep.subr.mxu0 0.0
    %1764 = vmatpush1.msra.mxu0 0.0
    %1765 = vmatprep.subr.mxu0 0.0
    %1766 = vmatpush1.msra.mxu0 0.0
    %1767 = vmatprep.subr.mxu0 0.0
    %1768 = vmatpush1.msra.mxu0 0.0
    %1769 = vmatprep.subr.mxu0 0.0
    %1770 = vmatpush1.msra.mxu0 0.0
    %1771 = vmatprep.subr.mxu0 0.0
    %1772 = vmatpush1.msra.mxu0 0.0
    %1773 = vmatprep.subr.mxu0 0.0
    %1774 = vmatpush1.msra.mxu0 0.0
    %1775 = vmatprep.subr.mxu0 0.0
    %1776 = vmatpush1.msra.mxu0 0.0
    %1777 = vmatprep.subr.mxu0 0.0
    %1778 = vmatpush1.msra.mxu0 0.0
    %1779 = vmatprep.subr.mxu0 0.0
    %1780 = vmatpush1.msra.mxu0 0.0
    %1781 = vmatprep.subr.mxu0 0.0
    %1782 = vmatpush1.msra.mxu0 0.0
    %1783 = vmatprep.subr.mxu0 0.0
    %1784 = vmatpush1.msra.mxu0 0.0
    %1785 = vmatprep.mubr.f32.mxu0 0.0
    %1786 = vmatmul.mubr.f32.gmra.mrb[0].mxu0 %v1719
    %v1787 = vpop.f32.mrb[0].mxu0
    %v1788 = vadd.f32 0.0, %v1787
    %v1789 = vpop.f32.mrb[0].mxu0
    %1790 = vdwg.mxu0
    %v1792 = vsel %vm927, %v1565, 0
    %1794 = vmatprep.subr.mxu0 0.0
    %1795 = vmatpush1.msra.mxu0 %v1571
    %1796 = vmatprep.subr.mxu0 0.0
    %1797 = vmatpush1.msra.mxu0 0.0
    %1798 = vmatprep.subr.mxu0 0.0
    %1799 = vmatpush1.msra.mxu0 0.0
    %1800 = vmatprep.subr.mxu0 0.0
    %1801 = vmatpush1.msra.mxu0 0.0
    %1802 = vmatprep.subr.mxu0 0.0
    %1803 = vmatpush1.msra.mxu0 0.0
    %1804 = vmatprep.subr.mxu0 0.0
    %1805 = vmatpush1.msra.mxu0 0.0
    %1806 = vmatprep.subr.mxu0 0.0
    %1807 = vmatpush1.msra.mxu0 0.0
    %1808 = vmatprep.subr.mxu0 0.0
    %1809 = vmatpush1.msra.mxu0 0.0
    %1810 = vmatprep.subr.mxu0 0.0
    %1811 = vmatpush1.msra.mxu0 0.0
    %1812 = vmatprep.subr.mxu0 0.0
    %1813 = vmatpush1.msra.mxu0 0.0
    %1814 = vmatprep.subr.mxu0 0.0
    %1815 = vmatpush1.msra.mxu0 0.0
    %1816 = vmatprep.subr.mxu0 0.0
    %1817 = vmatpush1.msra.mxu0 0.0
    %1818 = vmatprep.subr.mxu0 0.0
    %1819 = vmatpush1.msra.mxu0 0.0
    %1820 = vmatprep.subr.mxu0 0.0
    %1821 = vmatpush1.msra.mxu0 0.0
    %1822 = vmatprep.subr.mxu0 0.0
    %1823 = vmatpush1.msra.mxu0 0.0
    %1824 = vmatprep.subr.mxu0 0.0
    %1825 = vmatpush1.msra.mxu0 0.0
    %1826 = vmatprep.subr.mxu0 0.0
    %1827 = vmatpush1.msra.mxu0 0.0
    %1828 = vmatprep.subr.mxu0 0.0
    %1829 = vmatpush1.msra.mxu0 0.0
    %1830 = vmatprep.subr.mxu0 0.0
    %1831 = vmatpush1.msra.mxu0 0.0
    %1832 = vmatprep.subr.mxu0 0.0
    %1833 = vmatpush1.msra.mxu0 0.0
    %1834 = vmatprep.subr.mxu0 0.0
    %1835 = vmatpush1.msra.mxu0 0.0
    %1836 = vmatprep.subr.mxu0 0.0
    %1837 = vmatpush1.msra.mxu0 0.0
    %1838 = vmatprep.subr.mxu0 0.0
    %1839 = vmatpush1.msra.mxu0 0.0
    %1840 = vmatprep.subr.mxu0 0.0
    %1841 = vmatpush1.msra.mxu0 0.0
    %1842 = vmatprep.subr.mxu0 0.0
    %1843 = vmatpush1.msra.mxu0 0.0
    %1844 = vmatprep.subr.mxu0 0.0
    %1845 = vmatpush1.msra.mxu0 0.0
    %1846 = vmatprep.subr.mxu0 0.0
    %1847 = vmatpush1.msra.mxu0 0.0
    %1848 = vmatprep.subr.mxu0 0.0
    %1849 = vmatpush1.msra.mxu0 0.0
    %1850 = vmatprep.subr.mxu0 0.0
    %1851 = vmatpush1.msra.mxu0 0.0
    %1852 = vmatprep.subr.mxu0 0.0
    %1853 = vmatpush1.msra.mxu0 0.0
    %1854 = vmatprep.subr.mxu0 0.0
    %1855 = vmatpush1.msra.mxu0 0.0
    %1856 = vmatprep.subr.mxu0 0.0
    %1857 = vmatpush1.msra.mxu0 0.0
    %1858 = vmatprep.mubr.f32.mxu0 0.0
    %1859 = vmatmul.mubr.f32.gmra.mrb[0].mxu0 %v1792
    %v1860 = vpop.f32.mrb[0].mxu0
    %v1861 = vadd.f32 0.0, %v1860
    %v1862 = vpop.f32.mrb[0].mxu0
    %1863 = vdwg.mxu0
    %v1864 = vadd.f32 %v1642, %v1715
    %v1865 = vadd.f32 %v1864, %v1788
    %v1866 = vadd.f32 %v1865, %v1861
    %v1867 = vld [vmem:[%s5] sm:$0x1]
    %v1869 = vlaneseq
    %v1870 = vshrl.u32 %v1869, 7
    %v1871 = vsub.s32 0, %v1870
    %v1872 = vrot.slane %v1867, %v1871
    %v1874 = vadd.f32 %v1866, %v1872
    %1875 = vst [vmem:[#allocation2] sm:$0xff] %v1874
    // Predicated region
    $region26: #{tpu_custom_call.1} parent=1 // pred_check
      _
    $region27: #{tpu_custom_call.1} parent=1 // pred_check_branch
      %1877 = sbr.rel (0) target = $region29
    $region28: #{tpu_custom_call.1} parent=1 // pred_region
      %s1879 = ssub.s32 128, 128
      %1880 = vsyncadd [#allocation3], %s1879
      %s1882 = sshll.u32 [#allocation2], 4
      %s1883 = int_to_ptr.vmem [resolvable:$true] %s1882
      %1885 = dma.vmem_to_hbm [thread:$0]  %s1883, 128, %s6, [#allocation3]
    $region29: #{tpu_custom_call.1} parent=1 // pred_fallthru
      _
    // Predicated region
    $region30: #{tpu_custom_call.1} parent=1 // pred_check
      _
    $region31: #{tpu_custom_call.1} parent=1 // pred_check_branch
      %1887 = sbr.rel (0) target = $region33
    $region32: #{tpu_custom_call.1} parent=1 // pred_region
      %1888 = dma.done [#allocation3], 128
    $region33: #{tpu_custom_call.1} parent=1 // pred_fallthru
      _
    %1889 = vsyncpa [#allocation3], 1

</llo_original>
